<compile_context>
chip_gen: v6e
topology: v6e:2x2x1
jax: 0.10.0
libtpu: 0.0.40
codegen_flags: <defaults>
</compile_context>

<pallas_src>
import functools

import numpy as np
import jax
import jax.numpy as jnp
from jax.experimental import pallas as pl
from jax.experimental.pallas import tpu as pltpu

C1_OUT = 32     # conv1 out channels
C2_OUT = 64     # conv2 out channels
FC1_OUT = 128   # fc1 hidden size
KSIZE = 3       # conv kernel size
POOL = 2        # maxpool size / stride


def _round_up(x, m):
    return (x + m - 1) // m * m


def _fused_kernel(x_ref, w1e_ref, w1o_ref, b1_ref, w2e_ref, w2o_ref, b2_ref,
                  fc1w_ref, fc1b_ref, fc2w_ref, fc2b_ref, out_ref):
    """conv1+ReLU+pool1+conv2+ReLU+pool2+fc1+ReLU+fc2 for one batch tile."""
    x = x_ref[...]                                                 # (TB, S*C_in)

    # conv1 + bias + ReLU + maxpool1: even/odd Toeplitz matmuls, elementwise max.
    z_e = jnp.dot(x, w1e_ref[...], preferred_element_type=jnp.float32)
    z_o = jnp.dot(x, w1o_ref[...], preferred_element_type=jnp.float32)
    h1 = jnp.maximum(jnp.maximum(z_e, z_o) + b1_ref[...], 0.0)     # (TB, P1*32) f32

    # conv2 + bias + ReLU + maxpool2.
    h1c = h1.astype(w2e_ref.dtype)
    z_e = jnp.dot(h1c, w2e_ref[...], preferred_element_type=jnp.float32)
    z_o = jnp.dot(h1c, w2o_ref[...], preferred_element_type=jnp.float32)
    h2 = jnp.maximum(jnp.maximum(z_e, z_o) + b2_ref[...], 0.0)     # (TB, P2*64) f32

    # fc1 + ReLU.
    h3 = jnp.dot(h2.astype(fc1w_ref.dtype), fc1w_ref[...],
                 preferred_element_type=jnp.float32) + fc1b_ref[...]
    h3 = jnp.maximum(h3, 0.0)                                      # (TB, 128) f32

    # fc2 -> lane-padded logits.
    out = jnp.dot(h3.astype(fc2w_ref.dtype), fc2w_ref[...],
                  preferred_element_type=jnp.float32) + fc2b_ref[...]
    out_ref[...] = out.astype(out_ref.dtype)


def _conv_pool_matrices(w, in_len, out_len):
    """Conv1d taps (O,I,K) -> dense even/odd Toeplitz matrices (in_len*I, out_len*O).

    M_e[s*I+i, p*O+o] = w[o,i,k] if s == 2p+k   (conv output position 2p)
    M_o[s*I+i, p*O+o] = w[o,i,k] if s == 2p+1+k (conv output position 2p+1)
    so maxpool(relu(conv)) == relu(max(x @ M_e, x @ M_o) + bias).
    """
    O, I, K = w.shape
    sel_e = np.zeros((in_len, out_len, K), np.float32)
    sel_o = np.zeros((in_len, out_len, K), np.float32)
    for p in range(out_len):
        for k in range(K):
            sel_e[2 * p + k, p, k] = 1.0
            sel_o[2 * p + 1 + k, p, k] = 1.0
    w32 = w.astype(jnp.float32)
    m_e = jnp.einsum("spk,oik->sipo", sel_e, w32).reshape(in_len * I, out_len * O)
    m_o = jnp.einsum("spk,oik->sipo", sel_o, w32).reshape(in_len * I, out_len * O)
    return m_e, m_o


def cnn_base_recognizer_forward(x, params, *, compute_dtype=jnp.bfloat16,
                                batch_tile=256):
    """x: (B, seq_length, input_channels) float32. Returns (B, num_classes) logits."""
    B, S, C_in = x.shape
    L1 = S - KSIZE + 1
    P1 = L1 // POOL
    L2 = P1 - KSIZE + 1
    P2 = L2 // POOL
    num_classes = params["fc2_w"].shape[0]

    D_in = S * C_in
    N1 = P1 * C1_OUT
    N2 = P2 * C2_OUT
    N_out = _round_up(max(num_classes, 128), 128)   # lane-dense logits block

    # ---- host-side (trace-time) weight re-layout ----
    w1e, w1o = _conv_pool_matrices(params["conv1_w"], S, P1)
    w2e, w2o = _conv_pool_matrices(params["conv2_w"], P1, P2)
    b1 = jnp.tile(params["conv1_b"].astype(jnp.float32), P1).reshape(1, N1)
    b2 = jnp.tile(params["conv2_b"].astype(jnp.float32), P2).reshape(1, N2)

    # fc1: PyTorch flattens (B, 64, P2) channel-major (index o*P2+q); our activation
    # lanes are position-major (q*64+o) -> permute fc1_w rows on the host instead of
    # transposing activations per forward.
    fc1_w = params["fc1_w"].astype(jnp.float32).reshape(FC1_OUT, C2_OUT, P2)
    fc1_w = jnp.transpose(fc1_w, (2, 1, 0)).reshape(N2, FC1_OUT)
    fc1_b = params["fc1_b"].astype(jnp.float32).reshape(1, FC1_OUT)

    # fc2: transpose and zero-pad the class axis to a 128-lane multiple.
    fc2_w = jnp.transpose(params["fc2_w"]).astype(jnp.float32)            # (128, nc)
    fc2_w = jnp.pad(fc2_w, ((0, 0), (0, N_out - num_classes)))
    fc2_b = jnp.pad(params["fc2_b"].astype(jnp.float32),
                    (0, N_out - num_classes)).reshape(1, N_out)

    # ---- lane-dense, batch-tiled input ----
    TB = min(batch_tile, _round_up(B, 8))
    B_pad = _round_up(B, TB)
    x_flat = x.astype(jnp.float32).reshape(B, D_in)
    if B_pad != B:
        x_flat = jnp.pad(x_flat, ((0, B_pad - B), (0, 0)))

    cd = jnp.dtype(compute_dtype)
    x_flat = x_flat.astype(cd)
    w1e, w1o = w1e.astype(cd), w1o.astype(cd)
    w2e, w2o = w2e.astype(cd), w2o.astype(cd)
    fc1_w_c = fc1_w.astype(cd)
    fc2_w_c = fc2_w.astype(cd)

    full = lambda shape: pl.BlockSpec(shape, lambda i: (0, 0))
    flops = 2 * B_pad * (2 * D_in * N1 + 2 * N1 * N2 + N2 * FC1_OUT + FC1_OUT * N_out)
    bytes_accessed = ((B_pad * D_in + 2 * D_in * N1 + 2 * N1 * N2
                       + N2 * FC1_OUT + FC1_OUT * N_out) * cd.itemsize
                      + (N1 + N2 + FC1_OUT + N_out + B_pad * N_out) * 4)

    logits = pl.pallas_call(
        _fused_kernel,
        grid=(B_pad // TB,),
        in_specs=[
            pl.BlockSpec((TB, D_in), lambda i: (i, 0)),
            full((D_in, N1)), full((D_in, N1)), full((1, N1)),
            full((N1, N2)), full((N1, N2)), full((1, N2)),
            full((N2, FC1_OUT)), full((1, FC1_OUT)),
            full((FC1_OUT, N_out)), full((1, N_out)),
        ],
        out_specs=pl.BlockSpec((TB, N_out), lambda i: (i, 0)),
        out_shape=jax.ShapeDtypeStruct((B_pad, N_out), jnp.float32),
        compiler_params=pltpu.CompilerParams(
            dimension_semantics=("parallel",)),
        cost_estimate=pl.CostEstimate(flops=int(flops), transcendentals=0,
                                      bytes_accessed=int(bytes_accessed)),
    )(x_flat, w1e, w1o, b1, w2e, w2o, b2, fc1_w_c, fc1_b, fc2_w_c, fc2_b)

    return logits[:B, :num_classes]


def reference_forward(x, params):
    """Pure-JAX reference that mirrors the PyTorch forward exactly."""
    xc = jnp.transpose(x, (0, 2, 1))  # (B, C_in, S) -- what Conv1d sees after permute

    def conv1d(v, w, b):  # v: (B, I, L), w: (O, I, K)
        O, _, K = w.shape
        Lo = v.shape[-1] - K + 1
        out = jnp.zeros((v.shape[0], O, Lo), jnp.float32) + b[None, :, None]
        for k in range(K):
            out = out + jnp.einsum("bil,oi->bol", v[:, :, k:k + Lo], w[:, :, k])
        return out

    def maxpool(v):
        P = v.shape[-1] // 2
        return jnp.max(v[:, :, :2 * P].reshape(v.shape[0], v.shape[1], P, 2), axis=-1)

    y = maxpool(jax.nn.relu(conv1d(xc, params["conv1_w"], params["conv1_b"])))
    y = maxpool(jax.nn.relu(conv1d(y, params["conv2_w"], params["conv2_b"])))
    flat = y.reshape(y.shape[0], -1)
    h = jax.nn.relu(flat @ params["fc1_w"].T + params["fc1_b"])
    return h @ params["fc2_w"].T + params["fc2_b"]


if __name__ == "__main__":
    B, C_in, S, num_classes = 2, 4, 32, 8
    l1 = (S - KSIZE + 1) // POOL
    l2 = (l1 - KSIZE + 1) // POOL
    flatten_dim = C2_OUT * l2

    key = jax.random.PRNGKey(0)
    ks = jax.random.split(key, 9)
    params = {
        "conv1_w": 0.10 * jax.random.normal(ks[0], (C1_OUT, C_in, KSIZE), jnp.float32),
        "conv1_b": 0.10 * jax.random.normal(ks[1], (C1_OUT,), jnp.float32),
        "conv2_w": 0.05 * jax.random.normal(ks[2], (C2_OUT, C1_OUT, KSIZE), jnp.float32),
        "conv2_b": 0.10 * jax.random.normal(ks[3], (C2_OUT,), jnp.float32),
        "fc1_w": 0.05 * jax.random.normal(ks[4], (FC1_OUT, flatten_dim), jnp.float32),
        "fc1_b": 0.10 * jax.random.normal(ks[5], (FC1_OUT,), jnp.float32),
        "fc2_w": 0.10 * jax.random.normal(ks[6], (num_classes, FC1_OUT), jnp.float32),
        "fc2_b": 0.10 * jax.random.normal(ks[7], (num_classes,), jnp.float32),
    }
    x = jax.random.normal(ks[8], (B, S, C_in), jnp.float32)

    ref = jax.block_until_ready(reference_forward(x, params))

    # f32 matmul path: tight check.
    out_f32 = jax.block_until_ready(
        cnn_base_recognizer_forward(x, params, compute_dtype=jnp.float32))
    assert out_f32.shape == (B, num_classes), out_f32.shape
    assert jnp.allclose(out_f32, ref, atol=5e-3, rtol=5e-3), (out_f32, ref)

    # default bf16-matmul / f32-accumulate path (v6e/v7x fast path): loose check.
    out_bf16 = jax.block_until_ready(cnn_base_recognizer_forward(x, params))
    assert out_bf16.shape == (B, num_classes), out_bf16.shape
    assert jnp.allclose(out_bf16, ref, atol=5e-2, rtol=5e-2), (out_bf16, ref)

    print("KERNEL_OK")
</pallas_src>

<mosaic_0001>
module attributes {stable_mosaic.version = 11 : i64} {
  func.func @_fused_kernel(%arg0: i32, %arg1: memref<8x128xf32, #tpu.memory_space<vmem>>, %arg2: memref<128x480xf32, #tpu.memory_space<vmem>>, %arg3: memref<128x480xf32, #tpu.memory_space<vmem>>, %arg4: memref<1x480xf32, #tpu.memory_space<vmem>>, %arg5: memref<480x384xf32, #tpu.memory_space<vmem>>, %arg6: memref<480x384xf32, #tpu.memory_space<vmem>>, %arg7: memref<1x384xf32, #tpu.memory_space<vmem>>, %arg8: memref<384x128xf32, #tpu.memory_space<vmem>>, %arg9: memref<1x128xf32, #tpu.memory_space<vmem>>, %arg10: memref<128x128xf32, #tpu.memory_space<vmem>>, %arg11: memref<1x128xf32, #tpu.memory_space<vmem>>, %arg12: memref<8x128xf32, #tpu.memory_space<vmem>>) attributes {dimension_semantics = [#tpu.dimension_semantics<parallel>], iteration_bounds = array<i64: 1>, scalar_prefetch = 0 : i64, scratch_operands = 0 : i64, tpu.core_type = #tpu.core_type<tc>, window_params = [{transform_indices = @transform_0, window_bounds = array<i64: 8, 128>}, {pipeline_mode = #tpu.pipeline_mode<synchronous>, transform_indices = @transform_1, window_bounds = array<i64: 128, 480>}, {pipeline_mode = #tpu.pipeline_mode<synchronous>, transform_indices = @transform_2, window_bounds = array<i64: 128, 480>}, {pipeline_mode = #tpu.pipeline_mode<synchronous>, transform_indices = @transform_3, window_bounds = array<i64: 1, 480>}, {pipeline_mode = #tpu.pipeline_mode<synchronous>, transform_indices = @transform_4, window_bounds = array<i64: 480, 384>}, {pipeline_mode = #tpu.pipeline_mode<synchronous>, transform_indices = @transform_5, window_bounds = array<i64: 480, 384>}, {pipeline_mode = #tpu.pipeline_mode<synchronous>, transform_indices = @transform_6, window_bounds = array<i64: 1, 384>}, {pipeline_mode = #tpu.pipeline_mode<synchronous>, transform_indices = @transform_7, window_bounds = array<i64: 384, 128>}, {pipeline_mode = #tpu.pipeline_mode<synchronous>, transform_indices = @transform_8, window_bounds = array<i64: 1, 128>}, {pipeline_mode = #tpu.pipeline_mode<synchronous>, transform_indices = @transform_9, window_bounds = array<i64: 128, 128>}, {pipeline_mode = #tpu.pipeline_mode<synchronous>, transform_indices = @transform_10, window_bounds = array<i64: 1, 128>}, {transform_indices = @transform_11, window_bounds = array<i64: 8, 128>}]} {
    %c0 = arith.constant 0 : index
    %c0_0 = arith.constant 0 : index
    %0 = vector.load %arg1[%c0, %c0_0] : memref<8x128xf32, #tpu.memory_space<vmem>>, vector<8x128xf32>
    %c0_1 = arith.constant 0 : index
    %c0_2 = arith.constant 0 : index
    %1 = vector.load %arg2[%c0_1, %c0_2] : memref<128x480xf32, #tpu.memory_space<vmem>>, vector<128x480xf32>
    %cst = arith.constant dense<0.000000e+00> : vector<8x480xf32>
    %2 = tpu.matmul %0, %1, %cst {dimension_numbers = #tpu.dot_dimension_numbers<[1], [0], [0], [1], [0, 0, 1, 1], [], []>} : vector<8x128xf32>, vector<128x480xf32>, vector<8x480xf32> -> vector<8x480xf32>
    %c0_3 = arith.constant 0 : index
    %c0_4 = arith.constant 0 : index
    %3 = vector.load %arg3[%c0_3, %c0_4] : memref<128x480xf32, #tpu.memory_space<vmem>>, vector<128x480xf32>
    %cst_5 = arith.constant dense<0.000000e+00> : vector<8x480xf32>
    %4 = tpu.matmul %0, %3, %cst_5 {dimension_numbers = #tpu.dot_dimension_numbers<[1], [0], [0], [1], [0, 0, 1, 1], [], []>} : vector<8x128xf32>, vector<128x480xf32>, vector<8x480xf32> -> vector<8x480xf32>
    %5 = arith.maximumf %2, %4 : vector<8x480xf32>
    %c0_6 = arith.constant 0 : index
    %c0_7 = arith.constant 0 : index
    %6 = vector.load %arg4[%c0_6, %c0_7] : memref<1x480xf32, #tpu.memory_space<vmem>>, vector<1x480xf32>
    %7 = vector.broadcast %6 : vector<1x480xf32> to vector<8x480xf32>
    %8 = arith.addf %5, %7 : vector<8x480xf32>
    %cst_8 = arith.constant 0.000000e+00 : f32
    %9 = vector.broadcast %cst_8 : f32 to vector<8x480xf32>
    %10 = arith.maximumf %8, %9 : vector<8x480xf32>
    %c0_9 = arith.constant 0 : index
    %c0_10 = arith.constant 0 : index
    %11 = vector.load %arg5[%c0_9, %c0_10] : memref<480x384xf32, #tpu.memory_space<vmem>>, vector<480x384xf32>
    %cst_11 = arith.constant dense<0.000000e+00> : vector<8x384xf32>
    %12 = tpu.matmul %10, %11, %cst_11 {dimension_numbers = #tpu.dot_dimension_numbers<[1], [0], [0], [1], [0, 0, 1, 1], [], []>} : vector<8x480xf32>, vector<480x384xf32>, vector<8x384xf32> -> vector<8x384xf32>
    %c0_12 = arith.constant 0 : index
    %c0_13 = arith.constant 0 : index
    %13 = vector.load %arg6[%c0_12, %c0_13] : memref<480x384xf32, #tpu.memory_space<vmem>>, vector<480x384xf32>
    %cst_14 = arith.constant dense<0.000000e+00> : vector<8x384xf32>
    %14 = tpu.matmul %10, %13, %cst_14 {dimension_numbers = #tpu.dot_dimension_numbers<[1], [0], [0], [1], [0, 0, 1, 1], [], []>} : vector<8x480xf32>, vector<480x384xf32>, vector<8x384xf32> -> vector<8x384xf32>
    %15 = arith.maximumf %12, %14 : vector<8x384xf32>
    %c0_15 = arith.constant 0 : index
    %c0_16 = arith.constant 0 : index
    %16 = vector.load %arg7[%c0_15, %c0_16] : memref<1x384xf32, #tpu.memory_space<vmem>>, vector<1x384xf32>
    %17 = vector.broadcast %16 : vector<1x384xf32> to vector<8x384xf32>
    %18 = arith.addf %15, %17 : vector<8x384xf32>
    %cst_17 = arith.constant 0.000000e+00 : f32
    %19 = vector.broadcast %cst_17 : f32 to vector<8x384xf32>
    %20 = arith.maximumf %18, %19 : vector<8x384xf32>
    %c0_18 = arith.constant 0 : index
    %c0_19 = arith.constant 0 : index
    %21 = vector.load %arg8[%c0_18, %c0_19] : memref<384x128xf32, #tpu.memory_space<vmem>>, vector<384x128xf32>
    %cst_20 = arith.constant dense<0.000000e+00> : vector<8x128xf32>
    %22 = tpu.matmul %20, %21, %cst_20 {dimension_numbers = #tpu.dot_dimension_numbers<[1], [0], [0], [1], [0, 0, 1, 1], [], []>} : vector<8x384xf32>, vector<384x128xf32>, vector<8x128xf32> -> vector<8x128xf32>
    %c0_21 = arith.constant 0 : index
    %c0_22 = arith.constant 0 : index
    %23 = vector.load %arg9[%c0_21, %c0_22] : memref<1x128xf32, #tpu.memory_space<vmem>>, vector<1x128xf32>
    %24 = vector.broadcast %23 : vector<1x128xf32> to vector<8x128xf32>
    %25 = arith.addf %22, %24 : vector<8x128xf32>
    %cst_23 = arith.constant 0.000000e+00 : f32
    %26 = vector.broadcast %cst_23 : f32 to vector<8x128xf32>
    %27 = arith.maximumf %25, %26 : vector<8x128xf32>
    %c0_24 = arith.constant 0 : index
    %c0_25 = arith.constant 0 : index
    %28 = vector.load %arg10[%c0_24, %c0_25] : memref<128x128xf32, #tpu.memory_space<vmem>>, vector<128x128xf32>
    %cst_26 = arith.constant dense<0.000000e+00> : vector<8x128xf32>
    %29 = tpu.matmul %27, %28, %cst_26 {dimension_numbers = #tpu.dot_dimension_numbers<[1], [0], [0], [1], [0, 0, 1, 1], [], []>} : vector<8x128xf32>, vector<128x128xf32>, vector<8x128xf32> -> vector<8x128xf32>
    %c0_27 = arith.constant 0 : index
    %c0_28 = arith.constant 0 : index
    %30 = vector.load %arg11[%c0_27, %c0_28] : memref<1x128xf32, #tpu.memory_space<vmem>>, vector<1x128xf32>
    %31 = vector.broadcast %30 : vector<1x128xf32> to vector<8x128xf32>
    %32 = arith.addf %29, %31 : vector<8x128xf32>
    %c0_29 = arith.constant 0 : index
    %c0_30 = arith.constant 0 : index
    %33 = vector.load %arg12[%c0_29, %c0_30] : memref<8x128xf32, #tpu.memory_space<vmem>>, vector<8x128xf32>
    tpu.vector_store %arg12[%c0_29, %c0_30], %32 {strides = array<i32>} : memref<8x128xf32, #tpu.memory_space<vmem>>, vector<8x128xf32>,
    return
  }
  func.func @transform_0(%arg0: i32) -> (i32, i32) {
    %c0_i32 = arith.constant 0 : i32
    %c0_i32_0 = arith.constant 0 : i32
    return %arg0, %c0_i32 : i32, i32
  }
  func.func @transform_1(%arg0: i32) -> (i32, i32) {
    %c0_i32 = arith.constant 0 : i32
    %c0_i32_0 = arith.constant 0 : i32
    %c0_i32_1 = arith.constant 0 : i32
    return %c0_i32, %c0_i32_0 : i32, i32
  }
  func.func @transform_2(%arg0: i32) -> (i32, i32) {
    %c0_i32 = arith.constant 0 : i32
    %c0_i32_0 = arith.constant 0 : i32
    %c0_i32_1 = arith.constant 0 : i32
    return %c0_i32, %c0_i32_0 : i32, i32
  }
  func.func @transform_3(%arg0: i32) -> (i32, i32) {
    %c0_i32 = arith.constant 0 : i32
    %c0_i32_0 = arith.constant 0 : i32
    %c0_i32_1 = arith.constant 0 : i32
    return %c0_i32, %c0_i32_0 : i32, i32
  }
  func.func @transform_4(%arg0: i32) -> (i32, i32) {
    %c0_i32 = arith.constant 0 : i32
    %c0_i32_0 = arith.constant 0 : i32
    %c0_i32_1 = arith.constant 0 : i32
    return %c0_i32, %c0_i32_0 : i32, i32
  }
  func.func @transform_5(%arg0: i32) -> (i32, i32) {
    %c0_i32 = arith.constant 0 : i32
    %c0_i32_0 = arith.constant 0 : i32
    %c0_i32_1 = arith.constant 0 : i32
    return %c0_i32, %c0_i32_0 : i32, i32
  }
  func.func @transform_6(%arg0: i32) -> (i32, i32) {
    %c0_i32 = arith.constant 0 : i32
    %c0_i32_0 = arith.constant 0 : i32
    %c0_i32_1 = arith.constant 0 : i32
    return %c0_i32, %c0_i32_0 : i32, i32
  }
  func.func @transform_7(%arg0: i32) -> (i32, i32) {
    %c0_i32 = arith.constant 0 : i32
    %c0_i32_0 = arith.constant 0 : i32
    %c0_i32_1 = arith.constant 0 : i32
    return %c0_i32, %c0_i32_0 : i32, i32
  }
  func.func @transform_8(%arg0: i32) -> (i32, i32) {
    %c0_i32 = arith.constant 0 : i32
    %c0_i32_0 = arith.constant 0 : i32
    %c0_i32_1 = arith.constant 0 : i32
    return %c0_i32, %c0_i32_0 : i32, i32
  }
  func.func @transform_9(%arg0: i32) -> (i32, i32) {
    %c0_i32 = arith.constant 0 : i32
    %c0_i32_0 = arith.constant 0 : i32
    %c0_i32_1 = arith.constant 0 : i32
    return %c0_i32, %c0_i32_0 : i32, i32
  }
  func.func @transform_10(%arg0: i32) -> (i32, i32) {
    %c0_i32 = arith.constant 0 : i32
    %c0_i32_0 = arith.constant 0 : i32
    %c0_i32_1 = arith.constant 0 : i32
    return %c0_i32, %c0_i32_0 : i32, i32
  }
  func.func @transform_11(%arg0: i32) -> (i32, i32) {
    %c0_i32 = arith.constant 0 : i32
    %c0_i32_0 = arith.constant 0 : i32
    return %arg0, %c0_i32 : i32, i32
  }
}

</mosaic_0001>

<llo_original>
// kernel: tpu_custom_call.1
$region0: #{tpu_custom_call.1}
  #allocation0 [shape = 'u32[]', space=smem, size = 0x4, offset = 0x4, fixed_abs, tag = 'smem constant byte address 0x4 - core index']
  #allocation1 [shape = 'u32[144,128]{1,0:T(1,128)}', space=vmem, size = 0x12000, scoped, tag = 'internal scratch']
  %s0 = inlined_call_operand.vmem [shape: f32[8,128], index: 0, kind: input, shape index: {}]
  %s1 = inlined_call_operand.vmem [shape: f32[128,480], index: 1, kind: input, shape index: {}]
  %s2 = inlined_call_operand.vmem [shape: f32[128,480], index: 2, kind: input, shape index: {}]
  %s3 = inlined_call_operand.vmem [shape: f32[1,480], index: 3, kind: input, shape index: {}]
  %s4 = inlined_call_operand.vmem [shape: f32[480,384], index: 4, kind: input, shape index: {}]
  %s5 = inlined_call_operand.hbm [shape: f32[480,384], index: 5, kind: input, shape index: {}]
  %s6 = inlined_call_operand.vmem [shape: f32[1,384], index: 6, kind: input, shape index: {}]
  %s7 = inlined_call_operand.vmem [shape: f32[384,128], index: 7, kind: input, shape index: {}]
  %s8 = inlined_call_operand.vmem [shape: f32[1,128], index: 8, kind: input, shape index: {}]
  %s9 = inlined_call_operand.vmem [shape: f32[128,128], index: 9, kind: input, shape index: {}]
  %s10 = inlined_call_operand.vmem [shape: f32[1,128], index: 10, kind: input, shape index: {}]
  %s11 = inlined_call_operand.hbm [shape: f32[8,128], index: 11, kind: output, shape index: {}]
  %s12 = sld [smem:[#allocation0]]
  $region58: #{tpu_custom_call.1} parent=0
    _
  %s14 = ssub.s32 1, %s12
  %s15 = scalar_select 0, %s14, %s12
  $region1: #{tpu_custom_call.1} parent=0
    #allocation2 [shape = 'u8[737280]{0}', space=vmem, size = 0xb4000, scoped, tag = 'input window, operand 5, single buffered']
    #allocation3 [shape = 's32[1]{0}', space=sflag, size = 0x4, scoped, tag = 'scoped memory for tpu_custom_call.1']
    #allocation4 [shape = 's32[1]{0}', space=sflag, size = 0x4, scoped, tag = 'scoped memory for tpu_custom_call.1']
    #allocation5 [shape = 'u8[4096]{0}', space=vmem, size = 0x1000, scoped, tag = 'output window, operand 0, single buffered']
    %16 = vsyncpa [#allocation3], 0
    %17 = vsyncpa [#allocation4], 0
    // Predicated region
    $region2: #{tpu_custom_call.1} parent=1 // pred_check
      _
    $region3: #{tpu_custom_call.1} parent=1 // pred_check_branch
      %19 = sbr.rel (0) target = $region5
    $region4: #{tpu_custom_call.1} parent=1 // pred_region
      _
    $region5: #{tpu_custom_call.1} parent=1 // pred_fallthru
      _
    // Predicated region
    $region6: #{tpu_custom_call.1} parent=1 // pred_check
      _
    $region7: #{tpu_custom_call.1} parent=1 // pred_check_branch
      %21 = sbr.rel (0) target = $region9
    $region8: #{tpu_custom_call.1} parent=1 // pred_region
      _
    $region9: #{tpu_custom_call.1} parent=1 // pred_fallthru
      _
    // Predicated region
    $region10: #{tpu_custom_call.1} parent=1 // pred_check
      _
    $region11: #{tpu_custom_call.1} parent=1 // pred_check_branch
      %23 = sbr.rel (0) target = $region13
    $region12: #{tpu_custom_call.1} parent=1 // pred_region
      _
    $region13: #{tpu_custom_call.1} parent=1 // pred_fallthru
      _
    // Predicated region
    $region14: #{tpu_custom_call.1} parent=1 // pred_check
      _
    $region15: #{tpu_custom_call.1} parent=1 // pred_check_branch
      %25 = sbr.rel (0) target = $region17
    $region16: #{tpu_custom_call.1} parent=1 // pred_region
      _
    $region17: #{tpu_custom_call.1} parent=1 // pred_fallthru
      _
    // Predicated region
    $region18: #{tpu_custom_call.1} parent=1 // pred_check
      _
    $region19: #{tpu_custom_call.1} parent=1 // pred_check_branch
      %27 = sbr.rel (0) target = $region21
    $region20: #{tpu_custom_call.1} parent=1 // pred_region
      _
    $region21: #{tpu_custom_call.1} parent=1 // pred_fallthru
      _
    // Predicated region
    $region22: #{tpu_custom_call.1} parent=1 // pred_check
      _
    $region23: #{tpu_custom_call.1} parent=1 // pred_check_branch
      %29 = sbr.rel (0) target = $region25
    $region24: #{tpu_custom_call.1} parent=1 // pred_region
      %s31 = ssub.s32 23040, 23040
      %32 = vsyncadd [#allocation3], %s31
      %s33 = sshll.u32 [#allocation2], 4
      %s34 = int_to_ptr.vmem [resolvable:$true] %s33
      %39 = dma.hbm_to_vmem [thread:$0]  %s5, 23040, %s34, [#allocation3], 384, 384, 24
    $region25: #{tpu_custom_call.1} parent=1 // pred_fallthru
      _
    // Predicated region
    $region26: #{tpu_custom_call.1} parent=1 // pred_check
      _
    $region27: #{tpu_custom_call.1} parent=1 // pred_check_branch
      %41 = sbr.rel (0) target = $region29
    $region28: #{tpu_custom_call.1} parent=1 // pred_region
      _
    $region29: #{tpu_custom_call.1} parent=1 // pred_fallthru
      _
    // Predicated region
    $region30: #{tpu_custom_call.1} parent=1 // pred_check
      _
    $region31: #{tpu_custom_call.1} parent=1 // pred_check_branch
      %43 = sbr.rel (0) target = $region33
    $region32: #{tpu_custom_call.1} parent=1 // pred_region
      _
    $region33: #{tpu_custom_call.1} parent=1 // pred_fallthru
      _
    // Predicated region
    $region34: #{tpu_custom_call.1} parent=1 // pred_check
      _
    $region35: #{tpu_custom_call.1} parent=1 // pred_check_branch
      %45 = sbr.rel (0) target = $region37
    $region36: #{tpu_custom_call.1} parent=1 // pred_region
      _
    $region37: #{tpu_custom_call.1} parent=1 // pred_fallthru
      _
    // Predicated region
    $region38: #{tpu_custom_call.1} parent=1 // pred_check
      _
    $region39: #{tpu_custom_call.1} parent=1 // pred_check_branch
      %47 = sbr.rel (0) target = $region41
    $region40: #{tpu_custom_call.1} parent=1 // pred_region
      _
    $region41: #{tpu_custom_call.1} parent=1 // pred_fallthru
      _
    // Predicated region
    $region42: #{tpu_custom_call.1} parent=1 // pred_check
      _
    $region43: #{tpu_custom_call.1} parent=1 // pred_check_branch
      %49 = sbr.rel (0) target = $region45
    $region44: #{tpu_custom_call.1} parent=1 // pred_region
      _
    $region45: #{tpu_custom_call.1} parent=1 // pred_fallthru
      _
    // Predicated region
    $region46: #{tpu_custom_call.1} parent=1 // pred_check
      _
    $region47: #{tpu_custom_call.1} parent=1 // pred_check_branch
      %51 = sbr.rel (0) target = $region49
    $region48: #{tpu_custom_call.1} parent=1 // pred_region
      %52 = dma.done [#allocation3], 23040
    $region49: #{tpu_custom_call.1} parent=1 // pred_fallthru
      _
    %v53 = vld [vmem:[%s0] sm:$0xff]
    %v54 = vld [vmem:[%s1] sm:$0xff]
    %v55 = vld [vmem:[%s1 + $0x8] sm:$0xff]
    %v56 = vld [vmem:[%s1 + $0x10] sm:$0xff]
    %v57 = vld [vmem:[%s1 + $0x18] sm:$0xff]
    %v58 = vld [vmem:[%s1 + $0x20] sm:$0xff]
    %v59 = vld [vmem:[%s1 + $0x28] sm:$0xff]
    %v60 = vld [vmem:[%s1 + $0x30] sm:$0xff]
    %v61 = vld [vmem:[%s1 + $0x38] sm:$0xff]
    %v62 = vld [vmem:[%s1 + $0x40] sm:$0xff]
    %v63 = vld [vmem:[%s1 + $0x48] sm:$0xff]
    %v64 = vld [vmem:[%s1 + $0x50] sm:$0xff]
    %v65 = vld [vmem:[%s1 + $0x58] sm:$0xff]
    %v66 = vld [vmem:[%s1 + $0x60] sm:$0xff]
    %v67 = vld [vmem:[%s1 + $0x68] sm:$0xff]
    %v68 = vld [vmem:[%s1 + $0x70] sm:$0xff]
    %v69 = vld [vmem:[%s1 + $0x78] sm:$0xff]
    %v70 = vld [vmem:[%s1 + $0x80] sm:$0xff]
    %v71 = vld [vmem:[%s1 + $0x88] sm:$0xff]
    %v72 = vld [vmem:[%s1 + $0x90] sm:$0xff]
    %v73 = vld [vmem:[%s1 + $0x98] sm:$0xff]
    %v74 = vld [vmem:[%s1 + $0xa0] sm:$0xff]
    %v75 = vld [vmem:[%s1 + $0xa8] sm:$0xff]
    %v76 = vld [vmem:[%s1 + $0xb0] sm:$0xff]
    %v77 = vld [vmem:[%s1 + $0xb8] sm:$0xff]
    %v78 = vld [vmem:[%s1 + $0xc0] sm:$0xff]
    %v79 = vld [vmem:[%s1 + $0xc8] sm:$0xff]
    %v80 = vld [vmem:[%s1 + $0xd0] sm:$0xff]
    %v81 = vld [vmem:[%s1 + $0xd8] sm:$0xff]
    %v82 = vld [vmem:[%s1 + $0xe0] sm:$0xff]
    %v83 = vld [vmem:[%s1 + $0xe8] sm:$0xff]
    %v84 = vld [vmem:[%s1 + $0xf0] sm:$0xff]
    %v85 = vld [vmem:[%s1 + $0xf8] sm:$0xff]
    %v86 = vld [vmem:[%s1 + $0x100] sm:$0xff]
    %v87 = vld [vmem:[%s1 + $0x108] sm:$0xff]
    %v88 = vld [vmem:[%s1 + $0x110] sm:$0xff]
    %v89 = vld [vmem:[%s1 + $0x118] sm:$0xff]
    %v90 = vld [vmem:[%s1 + $0x120] sm:$0xff]
    %v91 = vld [vmem:[%s1 + $0x128] sm:$0xff]
    %v92 = vld [vmem:[%s1 + $0x130] sm:$0xff]
    %v93 = vld [vmem:[%s1 + $0x138] sm:$0xff]
    %v94 = vld [vmem:[%s1 + $0x140] sm:$0xff]
    %v95 = vld [vmem:[%s1 + $0x148] sm:$0xff]
    %v96 = vld [vmem:[%s1 + $0x150] sm:$0xff]
    %v97 = vld [vmem:[%s1 + $0x158] sm:$0xff]
    %v98 = vld [vmem:[%s1 + $0x160] sm:$0xff]
    %v99 = vld [vmem:[%s1 + $0x168] sm:$0xff]
    %v100 = vld [vmem:[%s1 + $0x170] sm:$0xff]
    %v101 = vld [vmem:[%s1 + $0x178] sm:$0xff]
    %v102 = vld [vmem:[%s1 + $0x180] sm:$0xff]
    %v103 = vld [vmem:[%s1 + $0x188] sm:$0xff]
    %v104 = vld [vmem:[%s1 + $0x190] sm:$0xff]
    %v105 = vld [vmem:[%s1 + $0x198] sm:$0xff]
    %v106 = vld [vmem:[%s1 + $0x1a0] sm:$0xff]
    %v107 = vld [vmem:[%s1 + $0x1a8] sm:$0xff]
    %v108 = vld [vmem:[%s1 + $0x1b0] sm:$0xff]
    %v109 = vld [vmem:[%s1 + $0x1b8] sm:$0xff]
    %v110 = vld [vmem:[%s1 + $0x1c0] sm:$0xff]
    %v111 = vld [vmem:[%s1 + $0x1c8] sm:$0xff]
    %v112 = vld [vmem:[%s1 + $0x1d0] sm:$0xff]
    %v113 = vld [vmem:[%s1 + $0x1d8] sm:$0xff]
    %v114 = vld [vmem:[%s1 + $0x1e0] sm:$0xff]
    %v115 = vld [vmem:[%s1 + $0x1e8] sm:$0xff]
    %v116 = vld [vmem:[%s1 + $0x1f0] sm:$0xff]
    %v117 = vld [vmem:[%s1 + $0x1f8] sm:$0xff]
    %118 = vmatprep.subr.mxu0 %v115
    %119 = vmatpush1.msra.mxu0 %v114
    %120 = vmatprep.subr.mxu0 %v111
    %121 = vmatpush1.msra.mxu0 %v110
    %122 = vmatprep.subr.mxu0 %v107
    %123 = vmatpush1.msra.mxu0 %v106
    %124 = vmatprep.subr.mxu0 %v103
    %125 = vmatpush1.msra.mxu0 %v102
    %126 = vmatprep.subr.mxu0 %v99
    %127 = vmatpush1.msra.mxu0 %v98
    %128 = vmatprep.subr.mxu0 %v95
    %129 = vmatpush1.msra.mxu0 %v94
    %130 = vmatprep.subr.mxu0 %v91
    %131 = vmatpush1.msra.mxu0 %v90
    %132 = vmatprep.subr.mxu0 %v87
    %133 = vmatpush1.msra.mxu0 %v86
    %134 = vmatprep.subr.mxu0 %v83
    %135 = vmatpush1.msra.mxu0 %v82
    %136 = vmatprep.subr.mxu0 %v79
    %137 = vmatpush1.msra.mxu0 %v78
    %138 = vmatprep.subr.mxu0 %v75
    %139 = vmatpush1.msra.mxu0 %v74
    %140 = vmatprep.subr.mxu0 %v71
    %141 = vmatpush1.msra.mxu0 %v70
    %142 = vmatprep.subr.mxu0 %v67
    %143 = vmatpush1.msra.mxu0 %v66
    %144 = vmatprep.subr.mxu0 %v63
    %145 = vmatpush1.msra.mxu0 %v62
    %146 = vmatprep.subr.mxu0 %v59
    %147 = vmatpush1.msra.mxu0 %v58
    %148 = vmatprep.subr.mxu0 %v55
    %149 = vmatpush1.msra.mxu0 %v54
    %150 = vmatprep.subr.mxu0 0.0
    %151 = vmatpush2.msra.mxu0 0.0
    %152 = vmatprep.subr.mxu0 0.0
    %153 = vmatpush2.msra.mxu0 0.0
    %154 = vmatprep.subr.mxu0 0.0
    %155 = vmatpush2.msra.mxu0 0.0
    %156 = vmatprep.subr.mxu0 0.0
    %157 = vmatpush2.msra.mxu0 0.0
    %158 = vmatprep.subr.mxu0 0.0
    %159 = vmatpush2.msra.mxu0 0.0
    %160 = vmatprep.subr.mxu0 0.0
    %161 = vmatpush2.msra.mxu0 0.0
    %162 = vmatprep.subr.mxu0 0.0
    %163 = vmatpush2.msra.mxu0 0.0
    %164 = vmatprep.subr.mxu0 0.0
    %165 = vmatpush2.msra.mxu0 0.0
    %166 = vmatprep.subr.mxu0 0.0
    %167 = vmatpush2.msra.mxu0 0.0
    %168 = vmatprep.subr.mxu0 0.0
    %169 = vmatpush2.msra.mxu0 0.0
    %170 = vmatprep.subr.mxu0 0.0
    %171 = vmatpush2.msra.mxu0 0.0
    %172 = vmatprep.subr.mxu0 0.0
    %173 = vmatpush2.msra.mxu0 0.0
    %174 = vmatprep.subr.mxu0 0.0
    %175 = vmatpush2.msra.mxu0 0.0
    %176 = vmatprep.subr.mxu0 0.0
    %177 = vmatpush2.msra.mxu0 0.0
    %178 = vmatprep.subr.mxu0 0.0
    %179 = vmatpush2.msra.mxu0 0.0
    %180 = vmatprep.subr.mxu0 0.0
    %181 = vmatpush2.msra.mxu0 0.0
    %182 = vmatprep.mubr.f32.mxu0 0.0
    %183 = vmatmul.mubr.f32.gmra.mxu0 %v53
    %v184 = vpop.f32.mrf.mxu0
    %v185 = vadd.f32 0.0, %v184
    %v186 = vpop.f32.mrf.mxu0
    %v187 = vadd.f32 0.0, %v186
    %188 = vdwg.mxu0
    %189 = vmatprep.subr.mxu0 %v117
    %190 = vmatpush1.msra.mxu0 %v116
    %191 = vmatprep.subr.mxu0 %v113
    %192 = vmatpush1.msra.mxu0 %v112
    %193 = vmatprep.subr.mxu0 %v109
    %194 = vmatpush1.msra.mxu0 %v108
    %195 = vmatprep.subr.mxu0 %v105
    %196 = vmatpush1.msra.mxu0 %v104
    %197 = vmatprep.subr.mxu0 %v101
    %198 = vmatpush1.msra.mxu0 %v100
    %199 = vmatprep.subr.mxu0 %v97
    %200 = vmatpush1.msra.mxu0 %v96
    %201 = vmatprep.subr.mxu0 %v93
    %202 = vmatpush1.msra.mxu0 %v92
    %203 = vmatprep.subr.mxu0 %v89
    %204 = vmatpush1.msra.mxu0 %v88
    %205 = vmatprep.subr.mxu0 %v85
    %206 = vmatpush1.msra.mxu0 %v84
    %207 = vmatprep.subr.mxu0 %v81
    %208 = vmatpush1.msra.mxu0 %v80
    %209 = vmatprep.subr.mxu0 %v77
    %210 = vmatpush1.msra.mxu0 %v76
    %211 = vmatprep.subr.mxu0 %v73
    %212 = vmatpush1.msra.mxu0 %v72
    %213 = vmatprep.subr.mxu0 %v69
    %214 = vmatpush1.msra.mxu0 %v68
    %215 = vmatprep.subr.mxu0 %v65
    %216 = vmatpush1.msra.mxu0 %v64
    %217 = vmatprep.subr.mxu0 %v61
    %218 = vmatpush1.msra.mxu0 %v60
    %219 = vmatprep.subr.mxu0 %v57
    %220 = vmatpush1.msra.mxu0 %v56
    %221 = vmatprep.subr.mxu0 0.0
    %222 = vmatpush2.msra.mxu0 0.0
    %223 = vmatprep.subr.mxu0 0.0
    %224 = vmatpush2.msra.mxu0 0.0
    %225 = vmatprep.subr.mxu0 0.0
    %226 = vmatpush2.msra.mxu0 0.0
    %227 = vmatprep.subr.mxu0 0.0
    %228 = vmatpush2.msra.mxu0 0.0
    %229 = vmatprep.subr.mxu0 0.0
    %230 = vmatpush2.msra.mxu0 0.0
    %231 = vmatprep.subr.mxu0 0.0
    %232 = vmatpush2.msra.mxu0 0.0
    %233 = vmatprep.subr.mxu0 0.0
    %234 = vmatpush2.msra.mxu0 0.0
    %235 = vmatprep.subr.mxu0 0.0
    %236 = vmatpush2.msra.mxu0 0.0
    %237 = vmatprep.subr.mxu0 0.0
    %238 = vmatpush2.msra.mxu0 0.0
    %239 = vmatprep.subr.mxu0 0.0
    %240 = vmatpush2.msra.mxu0 0.0
    %241 = vmatprep.subr.mxu0 0.0
    %242 = vmatpush2.msra.mxu0 0.0
    %243 = vmatprep.subr.mxu0 0.0
    %244 = vmatpush2.msra.mxu0 0.0
    %245 = vmatprep.subr.mxu0 0.0
    %246 = vmatpush2.msra.mxu0 0.0
    %247 = vmatprep.subr.mxu0 0.0
    %248 = vmatpush2.msra.mxu0 0.0
    %249 = vmatprep.subr.mxu0 0.0
    %250 = vmatpush2.msra.mxu0 0.0
    %251 = vmatprep.subr.mxu0 0.0
    %252 = vmatpush2.msra.mxu0 0.0
    %253 = vmatprep.mubr.f32.mxu0 0.0
    %254 = vmatmul.mubr.f32.gmra.mxu0 %v53
    %v255 = vpop.f32.mrf.mxu0
    %v256 = vadd.f32 0.0, %v255
    %v257 = vpop.f32.mrf.mxu0
    %v258 = vadd.f32 0.0, %v257
    %259 = vdwg.mxu0
    %v260 = vld [vmem:[%s2] sm:$0xff]
    %v261 = vld [vmem:[%s2 + $0x8] sm:$0xff]
    %v262 = vld [vmem:[%s2 + $0x10] sm:$0xff]
    %v263 = vld [vmem:[%s2 + $0x18] sm:$0xff]
    %v264 = vld [vmem:[%s2 + $0x20] sm:$0xff]
    %v265 = vld [vmem:[%s2 + $0x28] sm:$0xff]
    %v266 = vld [vmem:[%s2 + $0x30] sm:$0xff]
    %v267 = vld [vmem:[%s2 + $0x38] sm:$0xff]
    %v268 = vld [vmem:[%s2 + $0x40] sm:$0xff]
    %v269 = vld [vmem:[%s2 + $0x48] sm:$0xff]
    %v270 = vld [vmem:[%s2 + $0x50] sm:$0xff]
    %v271 = vld [vmem:[%s2 + $0x58] sm:$0xff]
    %v272 = vld [vmem:[%s2 + $0x60] sm:$0xff]
    %v273 = vld [vmem:[%s2 + $0x68] sm:$0xff]
    %v274 = vld [vmem:[%s2 + $0x70] sm:$0xff]
    %v275 = vld [vmem:[%s2 + $0x78] sm:$0xff]
    %v276 = vld [vmem:[%s2 + $0x80] sm:$0xff]
    %v277 = vld [vmem:[%s2 + $0x88] sm:$0xff]
    %v278 = vld [vmem:[%s2 + $0x90] sm:$0xff]
    %v279 = vld [vmem:[%s2 + $0x98] sm:$0xff]
    %v280 = vld [vmem:[%s2 + $0xa0] sm:$0xff]
    %v281 = vld [vmem:[%s2 + $0xa8] sm:$0xff]
    %v282 = vld [vmem:[%s2 + $0xb0] sm:$0xff]
    %v283 = vld [vmem:[%s2 + $0xb8] sm:$0xff]
    %v284 = vld [vmem:[%s2 + $0xc0] sm:$0xff]
    %v285 = vld [vmem:[%s2 + $0xc8] sm:$0xff]
    %v286 = vld [vmem:[%s2 + $0xd0] sm:$0xff]
    %v287 = vld [vmem:[%s2 + $0xd8] sm:$0xff]
    %v288 = vld [vmem:[%s2 + $0xe0] sm:$0xff]
    %v289 = vld [vmem:[%s2 + $0xe8] sm:$0xff]
    %v290 = vld [vmem:[%s2 + $0xf0] sm:$0xff]
    %v291 = vld [vmem:[%s2 + $0xf8] sm:$0xff]
    %v292 = vld [vmem:[%s2 + $0x100] sm:$0xff]
    %v293 = vld [vmem:[%s2 + $0x108] sm:$0xff]
    %v294 = vld [vmem:[%s2 + $0x110] sm:$0xff]
    %v295 = vld [vmem:[%s2 + $0x118] sm:$0xff]
    %v296 = vld [vmem:[%s2 + $0x120] sm:$0xff]
    %v297 = vld [vmem:[%s2 + $0x128] sm:$0xff]
    %v298 = vld [vmem:[%s2 + $0x130] sm:$0xff]
    %v299 = vld [vmem:[%s2 + $0x138] sm:$0xff]
    %v300 = vld [vmem:[%s2 + $0x140] sm:$0xff]
    %v301 = vld [vmem:[%s2 + $0x148] sm:$0xff]
    %v302 = vld [vmem:[%s2 + $0x150] sm:$0xff]
    %v303 = vld [vmem:[%s2 + $0x158] sm:$0xff]
    %v304 = vld [vmem:[%s2 + $0x160] sm:$0xff]
    %v305 = vld [vmem:[%s2 + $0x168] sm:$0xff]
    %v306 = vld [vmem:[%s2 + $0x170] sm:$0xff]
    %v307 = vld [vmem:[%s2 + $0x178] sm:$0xff]
    %v308 = vld [vmem:[%s2 + $0x180] sm:$0xff]
    %v309 = vld [vmem:[%s2 + $0x188] sm:$0xff]
    %v310 = vld [vmem:[%s2 + $0x190] sm:$0xff]
    %v311 = vld [vmem:[%s2 + $0x198] sm:$0xff]
    %v312 = vld [vmem:[%s2 + $0x1a0] sm:$0xff]
    %v313 = vld [vmem:[%s2 + $0x1a8] sm:$0xff]
    %v314 = vld [vmem:[%s2 + $0x1b0] sm:$0xff]
    %v315 = vld [vmem:[%s2 + $0x1b8] sm:$0xff]
    %v316 = vld [vmem:[%s2 + $0x1c0] sm:$0xff]
    %v317 = vld [vmem:[%s2 + $0x1c8] sm:$0xff]
    %v318 = vld [vmem:[%s2 + $0x1d0] sm:$0xff]
    %v319 = vld [vmem:[%s2 + $0x1d8] sm:$0xff]
    %v320 = vld [vmem:[%s2 + $0x1e0] sm:$0xff]
    %v321 = vld [vmem:[%s2 + $0x1e8] sm:$0xff]
    %v322 = vld [vmem:[%s2 + $0x1f0] sm:$0xff]
    %v323 = vld [vmem:[%s2 + $0x1f8] sm:$0xff]
    %324 = vmatprep.subr.mxu0 %v321
    %325 = vmatpush1.msra.mxu0 %v320
    %326 = vmatprep.subr.mxu0 %v317
    %327 = vmatpush1.msra.mxu0 %v316
    %328 = vmatprep.subr.mxu0 %v313
    %329 = vmatpush1.msra.mxu0 %v312
    %330 = vmatprep.subr.mxu0 %v309
    %331 = vmatpush1.msra.mxu0 %v308
    %332 = vmatprep.subr.mxu0 %v305
    %333 = vmatpush1.msra.mxu0 %v304
    %334 = vmatprep.subr.mxu0 %v301
    %335 = vmatpush1.msra.mxu0 %v300
    %336 = vmatprep.subr.mxu0 %v297
    %337 = vmatpush1.msra.mxu0 %v296
    %338 = vmatprep.subr.mxu0 %v293
    %339 = vmatpush1.msra.mxu0 %v292
    %340 = vmatprep.subr.mxu0 %v289
    %341 = vmatpush1.msra.mxu0 %v288
    %342 = vmatprep.subr.mxu0 %v285
    %343 = vmatpush1.msra.mxu0 %v284
    %344 = vmatprep.subr.mxu0 %v281
    %345 = vmatpush1.msra.mxu0 %v280
    %346 = vmatprep.subr.mxu0 %v277
    %347 = vmatpush1.msra.mxu0 %v276
    %348 = vmatprep.subr.mxu0 %v273
    %349 = vmatpush1.msra.mxu0 %v272
    %350 = vmatprep.subr.mxu0 %v269
    %351 = vmatpush1.msra.mxu0 %v268
    %352 = vmatprep.subr.mxu0 %v265
    %353 = vmatpush1.msra.mxu0 %v264
    %354 = vmatprep.subr.mxu0 %v261
    %355 = vmatpush1.msra.mxu0 %v260
    %356 = vmatprep.subr.mxu0 0.0
    %357 = vmatpush2.msra.mxu0 0.0
    %358 = vmatprep.subr.mxu0 0.0
    %359 = vmatpush2.msra.mxu0 0.0
    %360 = vmatprep.subr.mxu0 0.0
    %361 = vmatpush2.msra.mxu0 0.0
    %362 = vmatprep.subr.mxu0 0.0
    %363 = vmatpush2.msra.mxu0 0.0
    %364 = vmatprep.subr.mxu0 0.0
    %365 = vmatpush2.msra.mxu0 0.0
    %366 = vmatprep.subr.mxu0 0.0
    %367 = vmatpush2.msra.mxu0 0.0
    %368 = vmatprep.subr.mxu0 0.0
    %369 = vmatpush2.msra.mxu0 0.0
    %370 = vmatprep.subr.mxu0 0.0
    %371 = vmatpush2.msra.mxu0 0.0
    %372 = vmatprep.subr.mxu0 0.0
    %373 = vmatpush2.msra.mxu0 0.0
    %374 = vmatprep.subr.mxu0 0.0
    %375 = vmatpush2.msra.mxu0 0.0
    %376 = vmatprep.subr.mxu0 0.0
    %377 = vmatpush2.msra.mxu0 0.0
    %378 = vmatprep.subr.mxu0 0.0
    %379 = vmatpush2.msra.mxu0 0.0
    %380 = vmatprep.subr.mxu0 0.0
    %381 = vmatpush2.msra.mxu0 0.0
    %382 = vmatprep.subr.mxu0 0.0
    %383 = vmatpush2.msra.mxu0 0.0
    %384 = vmatprep.subr.mxu0 0.0
    %385 = vmatpush2.msra.mxu0 0.0
    %386 = vmatprep.subr.mxu0 0.0
    %387 = vmatpush2.msra.mxu0 0.0
    %388 = vmatprep.mubr.f32.mxu0 0.0
    %389 = vmatmul.mubr.f32.gmra.mxu0 %v53
    %v390 = vpop.f32.mrf.mxu0
    %v391 = vadd.f32 0.0, %v390
    %v392 = vpop.f32.mrf.mxu0
    %v393 = vadd.f32 0.0, %v392
    %394 = vdwg.mxu0
    %395 = vmatprep.subr.mxu0 %v323
    %396 = vmatpush1.msra.mxu0 %v322
    %397 = vmatprep.subr.mxu0 %v319
    %398 = vmatpush1.msra.mxu0 %v318
    %399 = vmatprep.subr.mxu0 %v315
    %400 = vmatpush1.msra.mxu0 %v314
    %401 = vmatprep.subr.mxu0 %v311
    %402 = vmatpush1.msra.mxu0 %v310
    %403 = vmatprep.subr.mxu0 %v307
    %404 = vmatpush1.msra.mxu0 %v306
    %405 = vmatprep.subr.mxu0 %v303
    %406 = vmatpush1.msra.mxu0 %v302
    %407 = vmatprep.subr.mxu0 %v299
    %408 = vmatpush1.msra.mxu0 %v298
    %409 = vmatprep.subr.mxu0 %v295
    %410 = vmatpush1.msra.mxu0 %v294
    %411 = vmatprep.subr.mxu0 %v291
    %412 = vmatpush1.msra.mxu0 %v290
    %413 = vmatprep.subr.mxu0 %v287
    %414 = vmatpush1.msra.mxu0 %v286
    %415 = vmatprep.subr.mxu0 %v283
    %416 = vmatpush1.msra.mxu0 %v282
    %417 = vmatprep.subr.mxu0 %v279
    %418 = vmatpush1.msra.mxu0 %v278
    %419 = vmatprep.subr.mxu0 %v275
    %420 = vmatpush1.msra.mxu0 %v274
    %421 = vmatprep.subr.mxu0 %v271
    %422 = vmatpush1.msra.mxu0 %v270
    %423 = vmatprep.subr.mxu0 %v267
    %424 = vmatpush1.msra.mxu0 %v266
    %425 = vmatprep.subr.mxu0 %v263
    %426 = vmatpush1.msra.mxu0 %v262
    %427 = vmatprep.subr.mxu0 0.0
    %428 = vmatpush2.msra.mxu0 0.0
    %429 = vmatprep.subr.mxu0 0.0
    %430 = vmatpush2.msra.mxu0 0.0
    %431 = vmatprep.subr.mxu0 0.0
    %432 = vmatpush2.msra.mxu0 0.0
    %433 = vmatprep.subr.mxu0 0.0
    %434 = vmatpush2.msra.mxu0 0.0
    %435 = vmatprep.subr.mxu0 0.0
    %436 = vmatpush2.msra.mxu0 0.0
    %437 = vmatprep.subr.mxu0 0.0
    %438 = vmatpush2.msra.mxu0 0.0
    %439 = vmatprep.subr.mxu0 0.0
    %440 = vmatpush2.msra.mxu0 0.0
    %441 = vmatprep.subr.mxu0 0.0
    %442 = vmatpush2.msra.mxu0 0.0
    %443 = vmatprep.subr.mxu0 0.0
    %444 = vmatpush2.msra.mxu0 0.0
    %445 = vmatprep.subr.mxu0 0.0
    %446 = vmatpush2.msra.mxu0 0.0
    %447 = vmatprep.subr.mxu0 0.0
    %448 = vmatpush2.msra.mxu0 0.0
    %449 = vmatprep.subr.mxu0 0.0
    %450 = vmatpush2.msra.mxu0 0.0
    %451 = vmatprep.subr.mxu0 0.0
    %452 = vmatpush2.msra.mxu0 0.0
    %453 = vmatprep.subr.mxu0 0.0
    %454 = vmatpush2.msra.mxu0 0.0
    %455 = vmatprep.subr.mxu0 0.0
    %456 = vmatpush2.msra.mxu0 0.0
    %457 = vmatprep.subr.mxu0 0.0
    %458 = vmatpush2.msra.mxu0 0.0
    %459 = vmatprep.mubr.f32.mxu0 0.0
    %460 = vmatmul.mubr.f32.gmra.mxu0 %v53
    %v461 = vpop.f32.mrf.mxu0
    %v462 = vadd.f32 0.0, %v461
    %v463 = vpop.f32.mrf.mxu0
    %v464 = vadd.f32 0.0, %v463
    %465 = vdwg.mxu0
    %v466 = vmax.f32 %v185, %v391
    %v467 = vmax.f32 %v187, %v393
    %v468 = vmax.f32 %v256, %v462
    %v469 = vmax.f32 %v258, %v464
    %v470 = vld [vmem:[%s3] sm:$0xf]
    %v472 = vlaneseq
    %v473 = vshrl.u32 %v472, 7
    %v474 = vsub.s32 0, %v473
    %v475 = vrot.slane %v470, %v474
    %v476 = vlaneseq
    %v477 = vshrl.u32 %v476, 7
    %v478 = vsub.s32 1, %v477
    %v479 = vrot.slane %v470, %v478
    %v480 = vlaneseq
    %v481 = vshrl.u32 %v480, 7
    %v482 = vsub.s32 2, %v481
    %v483 = vrot.slane %v470, %v482
    %v484 = vlaneseq
    %v485 = vshrl.u32 %v484, 7
    %v486 = vsub.s32 3, %v485
    %v487 = vrot.slane %v470, %v486
    %v492 = vadd.f32 %v466, %v475
    %v493 = vadd.f32 %v467, %v479
    %v494 = vadd.f32 %v468, %v483
    %v495 = vadd.f32 %v469, %v487
    %v496 = vmax.f32 %v492, 0.0
    %v497 = vmax.f32 %v493, 0.0
    %v498 = vmax.f32 %v494, 0.0
    %v499 = vmax.f32 %v495, 0.0
    %v500 = vld [vmem:[%s4] sm:$0xff]
    %v501 = vld [vmem:[%s4 + $0x8] sm:$0xff]
    %v502 = vld [vmem:[%s4 + $0x10] sm:$0xff]
    %v503 = vld [vmem:[%s4 + $0x18] sm:$0xff]
    %v504 = vld [vmem:[%s4 + $0x20] sm:$0xff]
    %v505 = vld [vmem:[%s4 + $0x28] sm:$0xff]
    %v506 = vld [vmem:[%s4 + $0x30] sm:$0xff]
    %v507 = vld [vmem:[%s4 + $0x38] sm:$0xff]
    %v508 = vld [vmem:[%s4 + $0x40] sm:$0xff]
    %v509 = vld [vmem:[%s4 + $0x48] sm:$0xff]
    %v510 = vld [vmem:[%s4 + $0x50] sm:$0xff]
    %v511 = vld [vmem:[%s4 + $0x58] sm:$0xff]
    %v512 = vld [vmem:[%s4 + $0x60] sm:$0xff]
    %v513 = vld [vmem:[%s4 + $0x68] sm:$0xff]
    %v514 = vld [vmem:[%s4 + $0x70] sm:$0xff]
    %v515 = vld [vmem:[%s4 + $0x78] sm:$0xff]
    %v516 = vld [vmem:[%s4 + $0x80] sm:$0xff]
    %v517 = vld [vmem:[%s4 + $0x88] sm:$0xff]
    %v518 = vld [vmem:[%s4 + $0x90] sm:$0xff]
    %v519 = vld [vmem:[%s4 + $0x98] sm:$0xff]
    %v520 = vld [vmem:[%s4 + $0xa0] sm:$0xff]
    %v521 = vld [vmem:[%s4 + $0xa8] sm:$0xff]
    %v522 = vld [vmem:[%s4 + $0xb0] sm:$0xff]
    %v523 = vld [vmem:[%s4 + $0xb8] sm:$0xff]
    %v524 = vld [vmem:[%s4 + $0xc0] sm:$0xff]
    %v525 = vld [vmem:[%s4 + $0xc8] sm:$0xff]
    %v526 = vld [vmem:[%s4 + $0xd0] sm:$0xff]
    %v527 = vld [vmem:[%s4 + $0xd8] sm:$0xff]
    %v528 = vld [vmem:[%s4 + $0xe0] sm:$0xff]
    %v529 = vld [vmem:[%s4 + $0xe8] sm:$0xff]
    %v530 = vld [vmem:[%s4 + $0xf0] sm:$0xff]
    %v531 = vld [vmem:[%s4 + $0xf8] sm:$0xff]
    %v532 = vld [vmem:[%s4 + $0x100] sm:$0xff]
    %v533 = vld [vmem:[%s4 + $0x108] sm:$0xff]
    %v534 = vld [vmem:[%s4 + $0x110] sm:$0xff]
    %v535 = vld [vmem:[%s4 + $0x118] sm:$0xff]
    %v536 = vld [vmem:[%s4 + $0x120] sm:$0xff]
    %v537 = vld [vmem:[%s4 + $0x128] sm:$0xff]
    %v538 = vld [vmem:[%s4 + $0x130] sm:$0xff]
    %v539 = vld [vmem:[%s4 + $0x138] sm:$0xff]
    %v540 = vld [vmem:[%s4 + $0x140] sm:$0xff]
    %v541 = vld [vmem:[%s4 + $0x148] sm:$0xff]
    %v542 = vld [vmem:[%s4 + $0x150] sm:$0xff]
    %v543 = vld [vmem:[%s4 + $0x158] sm:$0xff]
    %v544 = vld [vmem:[%s4 + $0x160] sm:$0xff]
    %v545 = vld [vmem:[%s4 + $0x168] sm:$0xff]
    %v546 = vld [vmem:[%s4 + $0x170] sm:$0xff]
    %v547 = vld [vmem:[%s4 + $0x178] sm:$0xff]
    %v548 = vld [vmem:[%s4 + $0x180] sm:$0xff]
    %v549 = vld [vmem:[%s4 + $0x188] sm:$0xff]
    %v550 = vld [vmem:[%s4 + $0x190] sm:$0xff]
    %v551 = vld [vmem:[%s4 + $0x198] sm:$0xff]
    %v552 = vld [vmem:[%s4 + $0x1a0] sm:$0xff]
    %v553 = vld [vmem:[%s4 + $0x1a8] sm:$0xff]
    %v554 = vld [vmem:[%s4 + $0x1b0] sm:$0xff]
    %v555 = vld [vmem:[%s4 + $0x1b8] sm:$0xff]
    %v556 = vld [vmem:[%s4 + $0x1c0] sm:$0xff]
    %v557 = vld [vmem:[%s4 + $0x1c8] sm:$0xff]
    %v558 = vld [vmem:[%s4 + $0x1d0] sm:$0xff]
    %v559 = vld [vmem:[%s4 + $0x1d8] sm:$0xff]
    %v560 = vld [vmem:[%s4 + $0x1e0] sm:$0xff]
    %v561 = vld [vmem:[%s4 + $0x1e8] sm:$0xff]
    %v562 = vld [vmem:[%s4 + $0x1f0] sm:$0xff]
    %v563 = vld [vmem:[%s4 + $0x1f8] sm:$0xff]
    %v564 = vld [vmem:[%s4 + $0x200] sm:$0xff]
    %v565 = vld [vmem:[%s4 + $0x208] sm:$0xff]
    %v566 = vld [vmem:[%s4 + $0x210] sm:$0xff]
    %v567 = vld [vmem:[%s4 + $0x218] sm:$0xff]
    %v568 = vld [vmem:[%s4 + $0x220] sm:$0xff]
    %v569 = vld [vmem:[%s4 + $0x228] sm:$0xff]
    %v570 = vld [vmem:[%s4 + $0x230] sm:$0xff]
    %v571 = vld [vmem:[%s4 + $0x238] sm:$0xff]
    %v572 = vld [vmem:[%s4 + $0x240] sm:$0xff]
    %v573 = vld [vmem:[%s4 + $0x248] sm:$0xff]
    %v574 = vld [vmem:[%s4 + $0x250] sm:$0xff]
    %v575 = vld [vmem:[%s4 + $0x258] sm:$0xff]
    %v576 = vld [vmem:[%s4 + $0x260] sm:$0xff]
    %v577 = vld [vmem:[%s4 + $0x268] sm:$0xff]
    %v578 = vld [vmem:[%s4 + $0x270] sm:$0xff]
    %v579 = vld [vmem:[%s4 + $0x278] sm:$0xff]
    %v580 = vld [vmem:[%s4 + $0x280] sm:$0xff]
    %v581 = vld [vmem:[%s4 + $0x288] sm:$0xff]
    %v582 = vld [vmem:[%s4 + $0x290] sm:$0xff]
    %v583 = vld [vmem:[%s4 + $0x298] sm:$0xff]
    %v584 = vld [vmem:[%s4 + $0x2a0] sm:$0xff]
    %v585 = vld [vmem:[%s4 + $0x2a8] sm:$0xff]
    %v586 = vld [vmem:[%s4 + $0x2b0] sm:$0xff]
    %v587 = vld [vmem:[%s4 + $0x2b8] sm:$0xff]
    %v588 = vld [vmem:[%s4 + $0x2c0] sm:$0xff]
    %v589 = vld [vmem:[%s4 + $0x2c8] sm:$0xff]
    %v590 = vld [vmem:[%s4 + $0x2d0] sm:$0xff]
    %v591 = vld [vmem:[%s4 + $0x2d8] sm:$0xff]
    %v592 = vld [vmem:[%s4 + $0x2e0] sm:$0xff]
    %v593 = vld [vmem:[%s4 + $0x2e8] sm:$0xff]
    %v594 = vld [vmem:[%s4 + $0x2f0] sm:$0xff]
    %v595 = vld [vmem:[%s4 + $0x2f8] sm:$0xff]
    %v596 = vld [vmem:[%s4 + $0x300] sm:$0xff]
    %v597 = vld [vmem:[%s4 + $0x308] sm:$0xff]
    %v598 = vld [vmem:[%s4 + $0x310] sm:$0xff]
    %v599 = vld [vmem:[%s4 + $0x318] sm:$0xff]
    %v600 = vld [vmem:[%s4 + $0x320] sm:$0xff]
    %v601 = vld [vmem:[%s4 + $0x328] sm:$0xff]
    %v602 = vld [vmem:[%s4 + $0x330] sm:$0xff]
    %v603 = vld [vmem:[%s4 + $0x338] sm:$0xff]
    %v604 = vld [vmem:[%s4 + $0x340] sm:$0xff]
    %v605 = vld [vmem:[%s4 + $0x348] sm:$0xff]
    %v606 = vld [vmem:[%s4 + $0x350] sm:$0xff]
    %v607 = vld [vmem:[%s4 + $0x358] sm:$0xff]
    %v608 = vld [vmem:[%s4 + $0x360] sm:$0xff]
    %v609 = vld [vmem:[%s4 + $0x368] sm:$0xff]
    %v610 = vld [vmem:[%s4 + $0x370] sm:$0xff]
    %v611 = vld [vmem:[%s4 + $0x378] sm:$0xff]
    %v612 = vld [vmem:[%s4 + $0x380] sm:$0xff]
    %v613 = vld [vmem:[%s4 + $0x388] sm:$0xff]
    %v614 = vld [vmem:[%s4 + $0x390] sm:$0xff]
    %v615 = vld [vmem:[%s4 + $0x398] sm:$0xff]
    %v616 = vld [vmem:[%s4 + $0x3a0] sm:$0xff]
    %v617 = vld [vmem:[%s4 + $0x3a8] sm:$0xff]
    %v618 = vld [vmem:[%s4 + $0x3b0] sm:$0xff]
    %v619 = vld [vmem:[%s4 + $0x3b8] sm:$0xff]
    %v620 = vld [vmem:[%s4 + $0x3c0] sm:$0xff]
    %v621 = vld [vmem:[%s4 + $0x3c8] sm:$0xff]
    %v622 = vld [vmem:[%s4 + $0x3d0] sm:$0xff]
    %v623 = vld [vmem:[%s4 + $0x3d8] sm:$0xff]
    %v624 = vld [vmem:[%s4 + $0x3e0] sm:$0xff]
    %v625 = vld [vmem:[%s4 + $0x3e8] sm:$0xff]
    %v626 = vld [vmem:[%s4 + $0x3f0] sm:$0xff]
    %v627 = vld [vmem:[%s4 + $0x3f8] sm:$0xff]
    %v628 = vld [vmem:[%s4 + $0x400] sm:$0xff]
    %v629 = vld [vmem:[%s4 + $0x408] sm:$0xff]
    %v630 = vld [vmem:[%s4 + $0x410] sm:$0xff]
    %v631 = vld [vmem:[%s4 + $0x418] sm:$0xff]
    %v632 = vld [vmem:[%s4 + $0x420] sm:$0xff]
    %v633 = vld [vmem:[%s4 + $0x428] sm:$0xff]
    %v634 = vld [vmem:[%s4 + $0x430] sm:$0xff]
    %v635 = vld [vmem:[%s4 + $0x438] sm:$0xff]
    %v636 = vld [vmem:[%s4 + $0x440] sm:$0xff]
    %v637 = vld [vmem:[%s4 + $0x448] sm:$0xff]
    %v638 = vld [vmem:[%s4 + $0x450] sm:$0xff]
    %v639 = vld [vmem:[%s4 + $0x458] sm:$0xff]
    %v640 = vld [vmem:[%s4 + $0x460] sm:$0xff]
    %v641 = vld [vmem:[%s4 + $0x468] sm:$0xff]
    %v642 = vld [vmem:[%s4 + $0x470] sm:$0xff]
    %v643 = vld [vmem:[%s4 + $0x478] sm:$0xff]
    %v644 = vld [vmem:[%s4 + $0x480] sm:$0xff]
    %v645 = vld [vmem:[%s4 + $0x488] sm:$0xff]
    %v646 = vld [vmem:[%s4 + $0x490] sm:$0xff]
    %v647 = vld [vmem:[%s4 + $0x498] sm:$0xff]
    %v648 = vld [vmem:[%s4 + $0x4a0] sm:$0xff]
    %v649 = vld [vmem:[%s4 + $0x4a8] sm:$0xff]
    %v650 = vld [vmem:[%s4 + $0x4b0] sm:$0xff]
    %v651 = vld [vmem:[%s4 + $0x4b8] sm:$0xff]
    %v652 = vld [vmem:[%s4 + $0x4c0] sm:$0xff]
    %v653 = vld [vmem:[%s4 + $0x4c8] sm:$0xff]
    %v654 = vld [vmem:[%s4 + $0x4d0] sm:$0xff]
    %v655 = vld [vmem:[%s4 + $0x4d8] sm:$0xff]
    %v656 = vld [vmem:[%s4 + $0x4e0] sm:$0xff]
    %v657 = vld [vmem:[%s4 + $0x4e8] sm:$0xff]
    %v658 = vld [vmem:[%s4 + $0x4f0] sm:$0xff]
    %v659 = vld [vmem:[%s4 + $0x4f8] sm:$0xff]
    %v660 = vld [vmem:[%s4 + $0x500] sm:$0xff]
    %v661 = vld [vmem:[%s4 + $0x508] sm:$0xff]
    %v662 = vld [vmem:[%s4 + $0x510] sm:$0xff]
    %v663 = vld [vmem:[%s4 + $0x518] sm:$0xff]
    %v664 = vld [vmem:[%s4 + $0x520] sm:$0xff]
    %v665 = vld [vmem:[%s4 + $0x528] sm:$0xff]
    %v666 = vld [vmem:[%s4 + $0x530] sm:$0xff]
    %v667 = vld [vmem:[%s4 + $0x538] sm:$0xff]
    %v668 = vld [vmem:[%s4 + $0x540] sm:$0xff]
    %v669 = vld [vmem:[%s4 + $0x548] sm:$0xff]
    %v670 = vld [vmem:[%s4 + $0x550] sm:$0xff]
    %v671 = vld [vmem:[%s4 + $0x558] sm:$0xff]
    %v672 = vld [vmem:[%s4 + $0x560] sm:$0xff]
    %v673 = vld [vmem:[%s4 + $0x568] sm:$0xff]
    %v674 = vld [vmem:[%s4 + $0x570] sm:$0xff]
    %v675 = vld [vmem:[%s4 + $0x578] sm:$0xff]
    %v676 = vld [vmem:[%s4 + $0x580] sm:$0xff]
    %v677 = vld [vmem:[%s4 + $0x588] sm:$0xff]
    %v678 = vld [vmem:[%s4 + $0x590] sm:$0xff]
    %v679 = vld [vmem:[%s4 + $0x598] sm:$0xff]
    %vm680 = vcmask 785408
    %v682 = vsel %vm680, %v499, 0
    %684 = vmatprep.subr.mxu0 %v546
    %685 = vmatpush1.msra.mxu0 %v545
    %686 = vmatprep.subr.mxu0 %v543
    %687 = vmatpush1.msra.mxu0 %v542
    %688 = vmatprep.subr.mxu0 %v540
    %689 = vmatpush1.msra.mxu0 %v539
    %690 = vmatprep.subr.mxu0 %v537
    %691 = vmatpush1.msra.mxu0 %v536
    %692 = vmatprep.subr.mxu0 %v534
    %693 = vmatpush1.msra.mxu0 %v533
    %694 = vmatprep.subr.mxu0 %v531
    %695 = vmatpush1.msra.mxu0 %v530
    %696 = vmatprep.subr.mxu0 %v528
    %697 = vmatpush1.msra.mxu0 %v527
    %698 = vmatprep.subr.mxu0 %v525
    %699 = vmatpush1.msra.mxu0 %v524
    %700 = vmatprep.subr.mxu0 %v522
    %701 = vmatpush1.msra.mxu0 %v521
    %702 = vmatprep.subr.mxu0 %v519
    %703 = vmatpush1.msra.mxu0 %v518
    %704 = vmatprep.subr.mxu0 %v516
    %705 = vmatpush1.msra.mxu0 %v515
    %706 = vmatprep.subr.mxu0 %v513
    %707 = vmatpush1.msra.mxu0 %v512
    %708 = vmatprep.subr.mxu0 %v510
    %709 = vmatpush1.msra.mxu0 %v509
    %710 = vmatprep.subr.mxu0 %v507
    %711 = vmatpush1.msra.mxu0 %v506
    %712 = vmatprep.subr.mxu0 %v504
    %713 = vmatpush1.msra.mxu0 %v503
    %714 = vmatprep.subr.mxu0 %v501
    %715 = vmatpush1.msra.mxu0 %v500
    %716 = vmatprep.subr.mxu0 %v594
    %717 = vmatpush2.msra.mxu0 %v593
    %718 = vmatprep.subr.mxu0 %v591
    %719 = vmatpush2.msra.mxu0 %v590
    %720 = vmatprep.subr.mxu0 %v588
    %721 = vmatpush2.msra.mxu0 %v587
    %722 = vmatprep.subr.mxu0 %v585
    %723 = vmatpush2.msra.mxu0 %v584
    %724 = vmatprep.subr.mxu0 %v582
    %725 = vmatpush2.msra.mxu0 %v581
    %726 = vmatprep.subr.mxu0 %v579
    %727 = vmatpush2.msra.mxu0 %v578
    %728 = vmatprep.subr.mxu0 %v576
    %729 = vmatpush2.msra.mxu0 %v575
    %730 = vmatprep.subr.mxu0 %v573
    %731 = vmatpush2.msra.mxu0 %v572
    %732 = vmatprep.subr.mxu0 %v570
    %733 = vmatpush2.msra.mxu0 %v569
    %734 = vmatprep.subr.mxu0 %v567
    %735 = vmatpush2.msra.mxu0 %v566
    %736 = vmatprep.subr.mxu0 %v564
    %737 = vmatpush2.msra.mxu0 %v563
    %738 = vmatprep.subr.mxu0 %v561
    %739 = vmatpush2.msra.mxu0 %v560
    %740 = vmatprep.subr.mxu0 %v558
    %741 = vmatpush2.msra.mxu0 %v557
    %742 = vmatprep.subr.mxu0 %v555
    %743 = vmatpush2.msra.mxu0 %v554
    %744 = vmatprep.subr.mxu0 %v552
    %745 = vmatpush2.msra.mxu0 %v551
    %746 = vmatprep.subr.mxu0 %v549
    %747 = vmatpush2.msra.mxu0 %v548
    %748 = vmatprep.mubr.f32.mxu0 %v497
    %749 = vmatmul.mubr.f32.gmra.mxu0 %v496
    %v750 = vpop.f32.mrf.mxu0
    %v751 = vadd.f32 0.0, %v750
    %v752 = vpop.f32.mrf.mxu0
    %v753 = vadd.f32 0.0, %v752
    %754 = vdwg.mxu0
    %755 = vmatprep.subr.mxu0 %v642
    %756 = vmatpush1.msra.mxu0 %v641
    %757 = vmatprep.subr.mxu0 %v639
    %758 = vmatpush1.msra.mxu0 %v638
    %759 = vmatprep.subr.mxu0 %v636
    %760 = vmatpush1.msra.mxu0 %v635
    %761 = vmatprep.subr.mxu0 %v633
    %762 = vmatpush1.msra.mxu0 %v632
    %763 = vmatprep.subr.mxu0 %v630
    %764 = vmatpush1.msra.mxu0 %v629
    %765 = vmatprep.subr.mxu0 %v627
    %766 = vmatpush1.msra.mxu0 %v626
    %767 = vmatprep.subr.mxu0 %v624
    %768 = vmatpush1.msra.mxu0 %v623
    %769 = vmatprep.subr.mxu0 %v621
    %770 = vmatpush1.msra.mxu0 %v620
    %771 = vmatprep.subr.mxu0 %v618
    %772 = vmatpush1.msra.mxu0 %v617
    %773 = vmatprep.subr.mxu0 %v615
    %774 = vmatpush1.msra.mxu0 %v614
    %775 = vmatprep.subr.mxu0 %v612
    %776 = vmatpush1.msra.mxu0 %v611
    %777 = vmatprep.subr.mxu0 %v609
    %778 = vmatpush1.msra.mxu0 %v608
    %779 = vmatprep.subr.mxu0 %v606
    %780 = vmatpush1.msra.mxu0 %v605
    %781 = vmatprep.subr.mxu0 %v603
    %782 = vmatpush1.msra.mxu0 %v602
    %783 = vmatprep.subr.mxu0 %v600
    %784 = vmatpush1.msra.mxu0 %v599
    %785 = vmatprep.subr.mxu0 %v597
    %786 = vmatpush1.msra.mxu0 %v596
    %787 = vmatprep.subr.mxu0 0.0
    %788 = vmatpush2.msra.mxu0 0.0
    %789 = vmatprep.subr.mxu0 0.0
    %790 = vmatpush2.msra.mxu0 0.0
    %791 = vmatprep.subr.mxu0 0.0
    %792 = vmatpush2.msra.mxu0 0.0
    %793 = vmatprep.subr.mxu0 0.0
    %794 = vmatpush2.msra.mxu0 0.0
    %795 = vmatprep.subr.mxu0 %v678
    %796 = vmatpush2.msra.mxu0 %v677
    %797 = vmatprep.subr.mxu0 %v675
    %798 = vmatpush2.msra.mxu0 %v674
    %799 = vmatprep.subr.mxu0 %v672
    %800 = vmatpush2.msra.mxu0 %v671
    %801 = vmatprep.subr.mxu0 %v669
    %802 = vmatpush2.msra.mxu0 %v668
    %803 = vmatprep.subr.mxu0 %v666
    %804 = vmatpush2.msra.mxu0 %v665
    %805 = vmatprep.subr.mxu0 %v663
    %806 = vmatpush2.msra.mxu0 %v662
    %807 = vmatprep.subr.mxu0 %v660
    %808 = vmatpush2.msra.mxu0 %v659
    %809 = vmatprep.subr.mxu0 %v657
    %810 = vmatpush2.msra.mxu0 %v656
    %811 = vmatprep.subr.mxu0 %v654
    %812 = vmatpush2.msra.mxu0 %v653
    %813 = vmatprep.subr.mxu0 %v651
    %814 = vmatpush2.msra.mxu0 %v650
    %815 = vmatprep.subr.mxu0 %v648
    %816 = vmatpush2.msra.mxu0 %v647
    %817 = vmatprep.subr.mxu0 %v645
    %818 = vmatpush2.msra.mxu0 %v644
    %819 = vmatprep.mubr.f32.mxu0 %v682
    %820 = vmatmul.mubr.f32.gmra.mxu0 %v498
    %v821 = vpop.f32.mrf.mxu0
    %v822 = vadd.f32 %v751, %v821
    %v823 = vpop.f32.mrf.mxu0
    %v824 = vadd.f32 %v753, %v823
    %825 = vdwg.mxu0
    %826 = vmatprep.subr.mxu0 0.0
    %827 = vmatpush1.msra.mxu0 %v547
    %828 = vmatprep.subr.mxu0 0.0
    %829 = vmatpush1.msra.mxu0 %v544
    %830 = vmatprep.subr.mxu0 0.0
    %831 = vmatpush1.msra.mxu0 %v541
    %832 = vmatprep.subr.mxu0 0.0
    %833 = vmatpush1.msra.mxu0 %v538
    %834 = vmatprep.subr.mxu0 0.0
    %835 = vmatpush1.msra.mxu0 %v535
    %836 = vmatprep.subr.mxu0 0.0
    %837 = vmatpush1.msra.mxu0 %v532
    %838 = vmatprep.subr.mxu0 0.0
    %839 = vmatpush1.msra.mxu0 %v529
    %840 = vmatprep.subr.mxu0 0.0
    %841 = vmatpush1.msra.mxu0 %v526
    %842 = vmatprep.subr.mxu0 0.0
    %843 = vmatpush1.msra.mxu0 %v523
    %844 = vmatprep.subr.mxu0 0.0
    %845 = vmatpush1.msra.mxu0 %v520
    %846 = vmatprep.subr.mxu0 0.0
    %847 = vmatpush1.msra.mxu0 %v517
    %848 = vmatprep.subr.mxu0 0.0
    %849 = vmatpush1.msra.mxu0 %v514
    %850 = vmatprep.subr.mxu0 0.0
    %851 = vmatpush1.msra.mxu0 %v511
    %852 = vmatprep.subr.mxu0 0.0
    %853 = vmatpush1.msra.mxu0 %v508
    %854 = vmatprep.subr.mxu0 0.0
    %855 = vmatpush1.msra.mxu0 %v505
    %856 = vmatprep.subr.mxu0 0.0
    %857 = vmatpush1.msra.mxu0 %v502
    %858 = vmatprep.subr.mxu0 0.0
    %859 = vmatpush2.msra.mxu0 %v595
    %860 = vmatprep.subr.mxu0 0.0
    %861 = vmatpush2.msra.mxu0 %v592
    %862 = vmatprep.subr.mxu0 0.0
    %863 = vmatpush2.msra.mxu0 %v589
    %864 = vmatprep.subr.mxu0 0.0
    %865 = vmatpush2.msra.mxu0 %v586
    %866 = vmatprep.subr.mxu0 0.0
    %867 = vmatpush2.msra.mxu0 %v583
    %868 = vmatprep.subr.mxu0 0.0
    %869 = vmatpush2.msra.mxu0 %v580
    %870 = vmatprep.subr.mxu0 0.0
    %871 = vmatpush2.msra.mxu0 %v577
    %872 = vmatprep.subr.mxu0 0.0
    %873 = vmatpush2.msra.mxu0 %v574
    %874 = vmatprep.subr.mxu0 0.0
    %875 = vmatpush2.msra.mxu0 %v571
    %876 = vmatprep.subr.mxu0 0.0
    %877 = vmatpush2.msra.mxu0 %v568
    %878 = vmatprep.subr.mxu0 0.0
    %879 = vmatpush2.msra.mxu0 %v565
    %880 = vmatprep.subr.mxu0 0.0
    %881 = vmatpush2.msra.mxu0 %v562
    %882 = vmatprep.subr.mxu0 0.0
    %883 = vmatpush2.msra.mxu0 %v559
    %884 = vmatprep.subr.mxu0 0.0
    %885 = vmatpush2.msra.mxu0 %v556
    %886 = vmatprep.subr.mxu0 0.0
    %887 = vmatpush2.msra.mxu0 %v553
    %888 = vmatprep.subr.mxu0 0.0
    %889 = vmatpush2.msra.mxu0 %v550
    %890 = vmatprep.mubr.f32.mxu0 %v497
    %891 = vmatmul.mubr.f32.gmra.mxu0 %v496
    %v892 = vpop.f32.mrf.mxu0
    %v893 = vadd.f32 0.0, %v892
    %v894 = vpop.f32.mrf.mxu0
    %895 = vdwg.mxu0
    %896 = vmatprep.subr.mxu0 0.0
    %897 = vmatpush1.msra.mxu0 %v643
    %898 = vmatprep.subr.mxu0 0.0
    %899 = vmatpush1.msra.mxu0 %v640
    %900 = vmatprep.subr.mxu0 0.0
    %901 = vmatpush1.msra.mxu0 %v637
    %902 = vmatprep.subr.mxu0 0.0
    %903 = vmatpush1.msra.mxu0 %v634
    %904 = vmatprep.subr.mxu0 0.0
    %905 = vmatpush1.msra.mxu0 %v631
    %906 = vmatprep.subr.mxu0 0.0
    %907 = vmatpush1.msra.mxu0 %v628
    %908 = vmatprep.subr.mxu0 0.0
    %909 = vmatpush1.msra.mxu0 %v625
    %910 = vmatprep.subr.mxu0 0.0
    %911 = vmatpush1.msra.mxu0 %v622
    %912 = vmatprep.subr.mxu0 0.0
    %913 = vmatpush1.msra.mxu0 %v619
    %914 = vmatprep.subr.mxu0 0.0
    %915 = vmatpush1.msra.mxu0 %v616
    %916 = vmatprep.subr.mxu0 0.0
    %917 = vmatpush1.msra.mxu0 %v613
    %918 = vmatprep.subr.mxu0 0.0
    %919 = vmatpush1.msra.mxu0 %v610
    %920 = vmatprep.subr.mxu0 0.0
    %921 = vmatpush1.msra.mxu0 %v607
    %922 = vmatprep.subr.mxu0 0.0
    %923 = vmatpush1.msra.mxu0 %v604
    %924 = vmatprep.subr.mxu0 0.0
    %925 = vmatpush1.msra.mxu0 %v601
    %926 = vmatprep.subr.mxu0 0.0
    %927 = vmatpush1.msra.mxu0 %v598
    %928 = vmatprep.subr.mxu0 0.0
    %929 = vmatpush2.msra.mxu0 0.0
    %930 = vmatprep.subr.mxu0 0.0
    %931 = vmatpush2.msra.mxu0 0.0
    %932 = vmatprep.subr.mxu0 0.0
    %933 = vmatpush2.msra.mxu0 0.0
    %934 = vmatprep.subr.mxu0 0.0
    %935 = vmatpush2.msra.mxu0 0.0
    %936 = vmatprep.subr.mxu0 0.0
    %937 = vmatpush2.msra.mxu0 %v679
    %938 = vmatprep.subr.mxu0 0.0
    %939 = vmatpush2.msra.mxu0 %v676
    %940 = vmatprep.subr.mxu0 0.0
    %941 = vmatpush2.msra.mxu0 %v673
    %942 = vmatprep.subr.mxu0 0.0
    %943 = vmatpush2.msra.mxu0 %v670
    %944 = vmatprep.subr.mxu0 0.0
    %945 = vmatpush2.msra.mxu0 %v667
    %946 = vmatprep.subr.mxu0 0.0
    %947 = vmatpush2.msra.mxu0 %v664
    %948 = vmatprep.subr.mxu0 0.0
    %949 = vmatpush2.msra.mxu0 %v661
    %950 = vmatprep.subr.mxu0 0.0
    %951 = vmatpush2.msra.mxu0 %v658
    %952 = vmatprep.subr.mxu0 0.0
    %953 = vmatpush2.msra.mxu0 %v655
    %954 = vmatprep.subr.mxu0 0.0
    %955 = vmatpush2.msra.mxu0 %v652
    %956 = vmatprep.subr.mxu0 0.0
    %957 = vmatpush2.msra.mxu0 %v649
    %958 = vmatprep.subr.mxu0 0.0
    %959 = vmatpush2.msra.mxu0 %v646
    %960 = vmatprep.mubr.f32.mxu0 %v682
    %961 = vmatmul.mubr.f32.gmra.mxu0 %v498
    %v962 = vpop.f32.mrf.mxu0
    %v963 = vadd.f32 %v893, %v962
    %v964 = vpop.f32.mrf.mxu0
    %965 = vdwg.mxu0
    %v966 = vld [vmem:[#allocation2] sm:$0xff]
    %v967 = vld [vmem:[#allocation2 + $0x8] sm:$0xff]
    %v968 = vld [vmem:[#allocation2 + $0x10] sm:$0xff]
    %v969 = vld [vmem:[#allocation2 + $0x18] sm:$0xff]
    %v970 = vld [vmem:[#allocation2 + $0x20] sm:$0xff]
    %v971 = vld [vmem:[#allocation2 + $0x28] sm:$0xff]
    %v972 = vld [vmem:[#allocation2 + $0x30] sm:$0xff]
    %v973 = vld [vmem:[#allocation2 + $0x38] sm:$0xff]
    %v974 = vld [vmem:[#allocation2 + $0x40] sm:$0xff]
    %v975 = vld [vmem:[#allocation2 + $0x48] sm:$0xff]
    %v976 = vld [vmem:[#allocation2 + $0x50] sm:$0xff]
    %v977 = vld [vmem:[#allocation2 + $0x58] sm:$0xff]
    %v978 = vld [vmem:[#allocation2 + $0x60] sm:$0xff]
    %v979 = vld [vmem:[#allocation2 + $0x68] sm:$0xff]
    %v980 = vld [vmem:[#allocation2 + $0x70] sm:$0xff]
    %v981 = vld [vmem:[#allocation2 + $0x78] sm:$0xff]
    %v982 = vld [vmem:[#allocation2 + $0x80] sm:$0xff]
    %v983 = vld [vmem:[#allocation2 + $0x88] sm:$0xff]
    %v984 = vld [vmem:[#allocation2 + $0x90] sm:$0xff]
    %v985 = vld [vmem:[#allocation2 + $0x98] sm:$0xff]
    %v986 = vld [vmem:[#allocation2 + $0xa0] sm:$0xff]
    %v987 = vld [vmem:[#allocation2 + $0xa8] sm:$0xff]
    %v988 = vld [vmem:[#allocation2 + $0xb0] sm:$0xff]
    %v989 = vld [vmem:[#allocation2 + $0xb8] sm:$0xff]
    %v990 = vld [vmem:[#allocation2 + $0xc0] sm:$0xff]
    %v991 = vld [vmem:[#allocation2 + $0xc8] sm:$0xff]
    %v992 = vld [vmem:[#allocation2 + $0xd0] sm:$0xff]
    %v993 = vld [vmem:[#allocation2 + $0xd8] sm:$0xff]
    %v994 = vld [vmem:[#allocation2 + $0xe0] sm:$0xff]
    %v995 = vld [vmem:[#allocation2 + $0xe8] sm:$0xff]
    %v996 = vld [vmem:[#allocation2 + $0xf0] sm:$0xff]
    %v997 = vld [vmem:[#allocation2 + $0xf8] sm:$0xff]
    %v998 = vld [vmem:[#allocation2 + $0x100] sm:$0xff]
    %v999 = vld [vmem:[#allocation2 + $0x108] sm:$0xff]
    %v1000 = vld [vmem:[#allocation2 + $0x110] sm:$0xff]
    %v1001 = vld [vmem:[#allocation2 + $0x118] sm:$0xff]
    %v1002 = vld [vmem:[#allocation2 + $0x120] sm:$0xff]
    %v1003 = vld [vmem:[#allocation2 + $0x128] sm:$0xff]
    %v1004 = vld [vmem:[#allocation2 + $0x130] sm:$0xff]
    %v1005 = vld [vmem:[#allocation2 + $0x138] sm:$0xff]
    %v1006 = vld [vmem:[#allocation2 + $0x140] sm:$0xff]
    %v1007 = vld [vmem:[#allocation2 + $0x148] sm:$0xff]
    %v1008 = vld [vmem:[#allocation2 + $0x150] sm:$0xff]
    %v1009 = vld [vmem:[#allocation2 + $0x158] sm:$0xff]
    %v1010 = vld [vmem:[#allocation2 + $0x160] sm:$0xff]
    %v1011 = vld [vmem:[#allocation2 + $0x168] sm:$0xff]
    %v1012 = vld [vmem:[#allocation2 + $0x170] sm:$0xff]
    %v1013 = vld [vmem:[#allocation2 + $0x178] sm:$0xff]
    %v1014 = vld [vmem:[#allocation2 + $0x180] sm:$0xff]
    %v1015 = vld [vmem:[#allocation2 + $0x188] sm:$0xff]
    %v1016 = vld [vmem:[#allocation2 + $0x190] sm:$0xff]
    %v1017 = vld [vmem:[#allocation2 + $0x198] sm:$0xff]
    %v1018 = vld [vmem:[#allocation2 + $0x1a0] sm:$0xff]
    %v1019 = vld [vmem:[#allocation2 + $0x1a8] sm:$0xff]
    %v1020 = vld [vmem:[#allocation2 + $0x1b0] sm:$0xff]
    %v1021 = vld [vmem:[#allocation2 + $0x1b8] sm:$0xff]
    %v1022 = vld [vmem:[#allocation2 + $0x1c0] sm:$0xff]
    %v1023 = vld [vmem:[#allocation2 + $0x1c8] sm:$0xff]
    %v1024 = vld [vmem:[#allocation2 + $0x1d0] sm:$0xff]
    %v1025 = vld [vmem:[#allocation2 + $0x1d8] sm:$0xff]
    %v1026 = vld [vmem:[#allocation2 + $0x1e0] sm:$0xff]
    %v1027 = vld [vmem:[#allocation2 + $0x1e8] sm:$0xff]
    %v1028 = vld [vmem:[#allocation2 + $0x1f0] sm:$0xff]
    %v1029 = vld [vmem:[#allocation2 + $0x1f8] sm:$0xff]
    %v1030 = vld [vmem:[#allocation2 + $0x200] sm:$0xff]
    %v1031 = vld [vmem:[#allocation2 + $0x208] sm:$0xff]
    %v1032 = vld [vmem:[#allocation2 + $0x210] sm:$0xff]
    %v1033 = vld [vmem:[#allocation2 + $0x218] sm:$0xff]
    %v1034 = vld [vmem:[#allocation2 + $0x220] sm:$0xff]
    %v1035 = vld [vmem:[#allocation2 + $0x228] sm:$0xff]
    %v1036 = vld [vmem:[#allocation2 + $0x230] sm:$0xff]
    %v1037 = vld [vmem:[#allocation2 + $0x238] sm:$0xff]
    %v1038 = vld [vmem:[#allocation2 + $0x240] sm:$0xff]
    %v1039 = vld [vmem:[#allocation2 + $0x248] sm:$0xff]
    %v1040 = vld [vmem:[#allocation2 + $0x250] sm:$0xff]
    %v1041 = vld [vmem:[#allocation2 + $0x258] sm:$0xff]
    %v1042 = vld [vmem:[#allocation2 + $0x260] sm:$0xff]
    %v1043 = vld [vmem:[#allocation2 + $0x268] sm:$0xff]
    %v1044 = vld [vmem:[#allocation2 + $0x270] sm:$0xff]
    %v1045 = vld [vmem:[#allocation2 + $0x278] sm:$0xff]
    %v1046 = vld [vmem:[#allocation2 + $0x280] sm:$0xff]
    %v1047 = vld [vmem:[#allocation2 + $0x288] sm:$0xff]
    %v1048 = vld [vmem:[#allocation2 + $0x290] sm:$0xff]
    %v1049 = vld [vmem:[#allocation2 + $0x298] sm:$0xff]
    %v1050 = vld [vmem:[#allocation2 + $0x2a0] sm:$0xff]
    %v1051 = vld [vmem:[#allocation2 + $0x2a8] sm:$0xff]
    %v1052 = vld [vmem:[#allocation2 + $0x2b0] sm:$0xff]
    %v1053 = vld [vmem:[#allocation2 + $0x2b8] sm:$0xff]
    %v1054 = vld [vmem:[#allocation2 + $0x2c0] sm:$0xff]
    %v1055 = vld [vmem:[#allocation2 + $0x2c8] sm:$0xff]
    %v1056 = vld [vmem:[#allocation2 + $0x2d0] sm:$0xff]
    %v1057 = vld [vmem:[#allocation2 + $0x2d8] sm:$0xff]
    %v1058 = vld [vmem:[#allocation2 + $0x2e0] sm:$0xff]
    %v1059 = vld [vmem:[#allocation2 + $0x2e8] sm:$0xff]
    %v1060 = vld [vmem:[#allocation2 + $0x2f0] sm:$0xff]
    %v1061 = vld [vmem:[#allocation2 + $0x2f8] sm:$0xff]
    %v1062 = vld [vmem:[#allocation2 + $0x300] sm:$0xff]
    %v1063 = vld [vmem:[#allocation2 + $0x308] sm:$0xff]
    %v1064 = vld [vmem:[#allocation2 + $0x310] sm:$0xff]
    %v1065 = vld [vmem:[#allocation2 + $0x318] sm:$0xff]
    %v1066 = vld [vmem:[#allocation2 + $0x320] sm:$0xff]
    %v1067 = vld [vmem:[#allocation2 + $0x328] sm:$0xff]
    %v1068 = vld [vmem:[#allocation2 + $0x330] sm:$0xff]
    %v1069 = vld [vmem:[#allocation2 + $0x338] sm:$0xff]
    %v1070 = vld [vmem:[#allocation2 + $0x340] sm:$0xff]
    %v1071 = vld [vmem:[#allocation2 + $0x348] sm:$0xff]
    %v1072 = vld [vmem:[#allocation2 + $0x350] sm:$0xff]
    %v1073 = vld [vmem:[#allocation2 + $0x358] sm:$0xff]
    %v1074 = vld [vmem:[#allocation2 + $0x360] sm:$0xff]
    %v1075 = vld [vmem:[#allocation2 + $0x368] sm:$0xff]
    %v1076 = vld [vmem:[#allocation2 + $0x370] sm:$0xff]
    %v1077 = vld [vmem:[#allocation2 + $0x378] sm:$0xff]
    %v1078 = vld [vmem:[#allocation2 + $0x380] sm:$0xff]
    %v1079 = vld [vmem:[#allocation2 + $0x388] sm:$0xff]
    %v1080 = vld [vmem:[#allocation2 + $0x390] sm:$0xff]
    %v1081 = vld [vmem:[#allocation2 + $0x398] sm:$0xff]
    %v1082 = vld [vmem:[#allocation2 + $0x3a0] sm:$0xff]
    %v1083 = vld [vmem:[#allocation2 + $0x3a8] sm:$0xff]
    %v1084 = vld [vmem:[#allocation2 + $0x3b0] sm:$0xff]
    %v1085 = vld [vmem:[#allocation2 + $0x3b8] sm:$0xff]
    %v1086 = vld [vmem:[#allocation2 + $0x3c0] sm:$0xff]
    %v1087 = vld [vmem:[#allocation2 + $0x3c8] sm:$0xff]
    %v1088 = vld [vmem:[#allocation2 + $0x3d0] sm:$0xff]
    %v1089 = vld [vmem:[#allocation2 + $0x3d8] sm:$0xff]
    %v1090 = vld [vmem:[#allocation2 + $0x3e0] sm:$0xff]
    %v1091 = vld [vmem:[#allocation2 + $0x3e8] sm:$0xff]
    %v1092 = vld [vmem:[#allocation2 + $0x3f0] sm:$0xff]
    %v1093 = vld [vmem:[#allocation2 + $0x3f8] sm:$0xff]
    %v1094 = vld [vmem:[#allocation2 + $0x400] sm:$0xff]
    %v1095 = vld [vmem:[#allocation2 + $0x408] sm:$0xff]
    %v1096 = vld [vmem:[#allocation2 + $0x410] sm:$0xff]
    %v1097 = vld [vmem:[#allocation2 + $0x418] sm:$0xff]
    %v1098 = vld [vmem:[#allocation2 + $0x420] sm:$0xff]
    %v1099 = vld [vmem:[#allocation2 + $0x428] sm:$0xff]
    %v1100 = vld [vmem:[#allocation2 + $0x430] sm:$0xff]
    %v1101 = vld [vmem:[#allocation2 + $0x438] sm:$0xff]
    %v1102 = vld [vmem:[#allocation2 + $0x440] sm:$0xff]
    %v1103 = vld [vmem:[#allocation2 + $0x448] sm:$0xff]
    %v1104 = vld [vmem:[#allocation2 + $0x450] sm:$0xff]
    %v1105 = vld [vmem:[#allocation2 + $0x458] sm:$0xff]
    %v1106 = vld [vmem:[#allocation2 + $0x460] sm:$0xff]
    %v1107 = vld [vmem:[#allocation2 + $0x468] sm:$0xff]
    %v1108 = vld [vmem:[#allocation2 + $0x470] sm:$0xff]
    %v1109 = vld [vmem:[#allocation2 + $0x478] sm:$0xff]
    %v1110 = vld [vmem:[#allocation2 + $0x480] sm:$0xff]
    %v1111 = vld [vmem:[#allocation2 + $0x488] sm:$0xff]
    %v1112 = vld [vmem:[#allocation2 + $0x490] sm:$0xff]
    %v1113 = vld [vmem:[#allocation2 + $0x498] sm:$0xff]
    %v1114 = vld [vmem:[#allocation2 + $0x4a0] sm:$0xff]
    %v1115 = vld [vmem:[#allocation2 + $0x4a8] sm:$0xff]
    %v1116 = vld [vmem:[#allocation2 + $0x4b0] sm:$0xff]
    %v1117 = vld [vmem:[#allocation2 + $0x4b8] sm:$0xff]
    %v1118 = vld [vmem:[#allocation2 + $0x4c0] sm:$0xff]
    %v1119 = vld [vmem:[#allocation2 + $0x4c8] sm:$0xff]
    %v1120 = vld [vmem:[#allocation2 + $0x4d0] sm:$0xff]
    %v1121 = vld [vmem:[#allocation2 + $0x4d8] sm:$0xff]
    %v1122 = vld [vmem:[#allocation2 + $0x4e0] sm:$0xff]
    %v1123 = vld [vmem:[#allocation2 + $0x4e8] sm:$0xff]
    %v1124 = vld [vmem:[#allocation2 + $0x4f0] sm:$0xff]
    %v1125 = vld [vmem:[#allocation2 + $0x4f8] sm:$0xff]
    %v1126 = vld [vmem:[#allocation2 + $0x500] sm:$0xff]
    %v1127 = vld [vmem:[#allocation2 + $0x508] sm:$0xff]
    %v1128 = vld [vmem:[#allocation2 + $0x510] sm:$0xff]
    %v1129 = vld [vmem:[#allocation2 + $0x518] sm:$0xff]
    %v1130 = vld [vmem:[#allocation2 + $0x520] sm:$0xff]
    %v1131 = vld [vmem:[#allocation2 + $0x528] sm:$0xff]
    %v1132 = vld [vmem:[#allocation2 + $0x530] sm:$0xff]
    %v1133 = vld [vmem:[#allocation2 + $0x538] sm:$0xff]
    %v1134 = vld [vmem:[#allocation2 + $0x540] sm:$0xff]
    %v1135 = vld [vmem:[#allocation2 + $0x548] sm:$0xff]
    %v1136 = vld [vmem:[#allocation2 + $0x550] sm:$0xff]
    %v1137 = vld [vmem:[#allocation2 + $0x558] sm:$0xff]
    %v1138 = vld [vmem:[#allocation2 + $0x560] sm:$0xff]
    %v1139 = vld [vmem:[#allocation2 + $0x568] sm:$0xff]
    %v1140 = vld [vmem:[#allocation2 + $0x570] sm:$0xff]
    %v1141 = vld [vmem:[#allocation2 + $0x578] sm:$0xff]
    %v1142 = vld [vmem:[#allocation2 + $0x580] sm:$0xff]
    %v1143 = vld [vmem:[#allocation2 + $0x588] sm:$0xff]
    %v1144 = vld [vmem:[#allocation2 + $0x590] sm:$0xff]
    %v1145 = vld [vmem:[#allocation2 + $0x598] sm:$0xff]
    %1146 = vmatprep.subr.mxu0 %v1012
    %1147 = vmatpush1.msra.mxu0 %v1011
    %1148 = vmatprep.subr.mxu0 %v1009
    %1149 = vmatpush1.msra.mxu0 %v1008
    %1150 = vmatprep.subr.mxu0 %v1006
    %1151 = vmatpush1.msra.mxu0 %v1005
    %1152 = vmatprep.subr.mxu0 %v1003
    %1153 = vmatpush1.msra.mxu0 %v1002
    %1154 = vmatprep.subr.mxu0 %v1000
    %1155 = vmatpush1.msra.mxu0 %v999
    %1156 = vmatprep.subr.mxu0 %v997
    %1157 = vmatpush1.msra.mxu0 %v996
    %1158 = vmatprep.subr.mxu0 %v994
    %1159 = vmatpush1.msra.mxu0 %v993
    %1160 = vmatprep.subr.mxu0 %v991
    %1161 = vmatpush1.msra.mxu0 %v990
    %1162 = vmatprep.subr.mxu0 %v988
    %1163 = vmatpush1.msra.mxu0 %v987
    %1164 = vmatprep.subr.mxu0 %v985
    %1165 = vmatpush1.msra.mxu0 %v984
    %1166 = vmatprep.subr.mxu0 %v982
    %1167 = vmatpush1.msra.mxu0 %v981
    %1168 = vmatprep.subr.mxu0 %v979
    %1169 = vmatpush1.msra.mxu0 %v978
    %1170 = vmatprep.subr.mxu0 %v976
    %1171 = vmatpush1.msra.mxu0 %v975
    %1172 = vmatprep.subr.mxu0 %v973
    %1173 = vmatpush1.msra.mxu0 %v972
    %1174 = vmatprep.subr.mxu0 %v970
    %1175 = vmatpush1.msra.mxu0 %v969
    %1176 = vmatprep.subr.mxu0 %v967
    %1177 = vmatpush1.msra.mxu0 %v966
    %1178 = vmatprep.subr.mxu0 %v1060
    %1179 = vmatpush2.msra.mxu0 %v1059
    %1180 = vmatprep.subr.mxu0 %v1057
    %1181 = vmatpush2.msra.mxu0 %v1056
    %1182 = vmatprep.subr.mxu0 %v1054
    %1183 = vmatpush2.msra.mxu0 %v1053
    %1184 = vmatprep.subr.mxu0 %v1051
    %1185 = vmatpush2.msra.mxu0 %v1050
    %1186 = vmatprep.subr.mxu0 %v1048
    %1187 = vmatpush2.msra.mxu0 %v1047
    %1188 = vmatprep.subr.mxu0 %v1045
    %1189 = vmatpush2.msra.mxu0 %v1044
    %1190 = vmatprep.subr.mxu0 %v1042
    %1191 = vmatpush2.msra.mxu0 %v1041
    %1192 = vmatprep.subr.mxu0 %v1039
    %1193 = vmatpush2.msra.mxu0 %v1038
    %1194 = vmatprep.subr.mxu0 %v1036
    %1195 = vmatpush2.msra.mxu0 %v1035
    %1196 = vmatprep.subr.mxu0 %v1033
    %1197 = vmatpush2.msra.mxu0 %v1032
    %1198 = vmatprep.subr.mxu0 %v1030
    %1199 = vmatpush2.msra.mxu0 %v1029
    %1200 = vmatprep.subr.mxu0 %v1027
    %1201 = vmatpush2.msra.mxu0 %v1026
    %1202 = vmatprep.subr.mxu0 %v1024
    %1203 = vmatpush2.msra.mxu0 %v1023
    %1204 = vmatprep.subr.mxu0 %v1021
    %1205 = vmatpush2.msra.mxu0 %v1020
    %1206 = vmatprep.subr.mxu0 %v1018
    %1207 = vmatpush2.msra.mxu0 %v1017
    %1208 = vmatprep.subr.mxu0 %v1015
    %1209 = vmatpush2.msra.mxu0 %v1014
    %1210 = vmatprep.mubr.f32.mxu0 %v497
    %1211 = vmatmul.mubr.f32.gmra.mxu0 %v496
    %v1212 = vpop.f32.mrf.mxu0
    %v1213 = vadd.f32 0.0, %v1212
    %v1214 = vpop.f32.mrf.mxu0
    %v1215 = vadd.f32 0.0, %v1214
    %1216 = vdwg.mxu0
    %1217 = vmatprep.subr.mxu0 %v1108
    %1218 = vmatpush1.msra.mxu0 %v1107
    %1219 = vmatprep.subr.mxu0 %v1105
    %1220 = vmatpush1.msra.mxu0 %v1104
    %1221 = vmatprep.subr.mxu0 %v1102
    %1222 = vmatpush1.msra.mxu0 %v1101
    %1223 = vmatprep.subr.mxu0 %v1099
    %1224 = vmatpush1.msra.mxu0 %v1098
    %1225 = vmatprep.subr.mxu0 %v1096
    %1226 = vmatpush1.msra.mxu0 %v1095
    %1227 = vmatprep.subr.mxu0 %v1093
    %1228 = vmatpush1.msra.mxu0 %v1092
    %1229 = vmatprep.subr.mxu0 %v1090
    %1230 = vmatpush1.msra.mxu0 %v1089
    %1231 = vmatprep.subr.mxu0 %v1087
    %1232 = vmatpush1.msra.mxu0 %v1086
    %1233 = vmatprep.subr.mxu0 %v1084
    %1234 = vmatpush1.msra.mxu0 %v1083
    %1235 = vmatprep.subr.mxu0 %v1081
    %1236 = vmatpush1.msra.mxu0 %v1080
    %1237 = vmatprep.subr.mxu0 %v1078
    %1238 = vmatpush1.msra.mxu0 %v1077
    %1239 = vmatprep.subr.mxu0 %v1075
    %1240 = vmatpush1.msra.mxu0 %v1074
    %1241 = vmatprep.subr.mxu0 %v1072
    %1242 = vmatpush1.msra.mxu0 %v1071
    %1243 = vmatprep.subr.mxu0 %v1069
    %1244 = vmatpush1.msra.mxu0 %v1068
    %1245 = vmatprep.subr.mxu0 %v1066
    %1246 = vmatpush1.msra.mxu0 %v1065
    %1247 = vmatprep.subr.mxu0 %v1063
    %1248 = vmatpush1.msra.mxu0 %v1062
    %1249 = vmatprep.subr.mxu0 0.0
    %1250 = vmatpush2.msra.mxu0 0.0
    %1251 = vmatprep.subr.mxu0 0.0
    %1252 = vmatpush2.msra.mxu0 0.0
    %1253 = vmatprep.subr.mxu0 0.0
    %1254 = vmatpush2.msra.mxu0 0.0
    %1255 = vmatprep.subr.mxu0 0.0
    %1256 = vmatpush2.msra.mxu0 0.0
    %1257 = vmatprep.subr.mxu0 %v1144
    %1258 = vmatpush2.msra.mxu0 %v1143
    %1259 = vmatprep.subr.mxu0 %v1141
    %1260 = vmatpush2.msra.mxu0 %v1140
    %1261 = vmatprep.subr.mxu0 %v1138
    %1262 = vmatpush2.msra.mxu0 %v1137
    %1263 = vmatprep.subr.mxu0 %v1135
    %1264 = vmatpush2.msra.mxu0 %v1134
    %1265 = vmatprep.subr.mxu0 %v1132
    %1266 = vmatpush2.msra.mxu0 %v1131
    %1267 = vmatprep.subr.mxu0 %v1129
    %1268 = vmatpush2.msra.mxu0 %v1128
    %1269 = vmatprep.subr.mxu0 %v1126
    %1270 = vmatpush2.msra.mxu0 %v1125
    %1271 = vmatprep.subr.mxu0 %v1123
    %1272 = vmatpush2.msra.mxu0 %v1122
    %1273 = vmatprep.subr.mxu0 %v1120
    %1274 = vmatpush2.msra.mxu0 %v1119
    %1275 = vmatprep.subr.mxu0 %v1117
    %1276 = vmatpush2.msra.mxu0 %v1116
    %1277 = vmatprep.subr.mxu0 %v1114
    %1278 = vmatpush2.msra.mxu0 %v1113
    %1279 = vmatprep.subr.mxu0 %v1111
    %1280 = vmatpush2.msra.mxu0 %v1110
    %1281 = vmatprep.mubr.f32.mxu0 %v682
    %1282 = vmatmul.mubr.f32.gmra.mxu0 %v498
    %v1283 = vpop.f32.mrf.mxu0
    %v1284 = vadd.f32 %v1213, %v1283
    %v1285 = vpop.f32.mrf.mxu0
    %v1286 = vadd.f32 %v1215, %v1285
    %1287 = vdwg.mxu0
    %1288 = vmatprep.subr.mxu0 0.0
    %1289 = vmatpush1.msra.mxu0 %v1013
    %1290 = vmatprep.subr.mxu0 0.0
    %1291 = vmatpush1.msra.mxu0 %v1010
    %1292 = vmatprep.subr.mxu0 0.0
    %1293 = vmatpush1.msra.mxu0 %v1007
    %1294 = vmatprep.subr.mxu0 0.0
    %1295 = vmatpush1.msra.mxu0 %v1004
    %1296 = vmatprep.subr.mxu0 0.0
    %1297 = vmatpush1.msra.mxu0 %v1001
    %1298 = vmatprep.subr.mxu0 0.0
    %1299 = vmatpush1.msra.mxu0 %v998
    %1300 = vmatprep.subr.mxu0 0.0
    %1301 = vmatpush1.msra.mxu0 %v995
    %1302 = vmatprep.subr.mxu0 0.0
    %1303 = vmatpush1.msra.mxu0 %v992
    %1304 = vmatprep.subr.mxu0 0.0
    %1305 = vmatpush1.msra.mxu0 %v989
    %1306 = vmatprep.subr.mxu0 0.0
    %1307 = vmatpush1.msra.mxu0 %v986
    %1308 = vmatprep.subr.mxu0 0.0
    %1309 = vmatpush1.msra.mxu0 %v983
    %1310 = vmatprep.subr.mxu0 0.0
    %1311 = vmatpush1.msra.mxu0 %v980
    %1312 = vmatprep.subr.mxu0 0.0
    %1313 = vmatpush1.msra.mxu0 %v977
    %1314 = vmatprep.subr.mxu0 0.0
    %1315 = vmatpush1.msra.mxu0 %v974
    %1316 = vmatprep.subr.mxu0 0.0
    %1317 = vmatpush1.msra.mxu0 %v971
    %1318 = vmatprep.subr.mxu0 0.0
    %1319 = vmatpush1.msra.mxu0 %v968
    %1320 = vmatprep.subr.mxu0 0.0
    %1321 = vmatpush2.msra.mxu0 %v1061
    %1322 = vmatprep.subr.mxu0 0.0
    %1323 = vmatpush2.msra.mxu0 %v1058
    %1324 = vmatprep.subr.mxu0 0.0
    %1325 = vmatpush2.msra.mxu0 %v1055
    %1326 = vmatprep.subr.mxu0 0.0
    %1327 = vmatpush2.msra.mxu0 %v1052
    %1328 = vmatprep.subr.mxu0 0.0
    %1329 = vmatpush2.msra.mxu0 %v1049
    %1330 = vmatprep.subr.mxu0 0.0
    %1331 = vmatpush2.msra.mxu0 %v1046
    %1332 = vmatprep.subr.mxu0 0.0
    %1333 = vmatpush2.msra.mxu0 %v1043
    %1334 = vmatprep.subr.mxu0 0.0
    %1335 = vmatpush2.msra.mxu0 %v1040
    %1336 = vmatprep.subr.mxu0 0.0
    %1337 = vmatpush2.msra.mxu0 %v1037
    %1338 = vmatprep.subr.mxu0 0.0
    %1339 = vmatpush2.msra.mxu0 %v1034
    %1340 = vmatprep.subr.mxu0 0.0
    %1341 = vmatpush2.msra.mxu0 %v1031
    %1342 = vmatprep.subr.mxu0 0.0
    %1343 = vmatpush2.msra.mxu0 %v1028
    %1344 = vmatprep.subr.mxu0 0.0
    %1345 = vmatpush2.msra.mxu0 %v1025
    %1346 = vmatprep.subr.mxu0 0.0
    %1347 = vmatpush2.msra.mxu0 %v1022
    %1348 = vmatprep.subr.mxu0 0.0
    %1349 = vmatpush2.msra.mxu0 %v1019
    %1350 = vmatprep.subr.mxu0 0.0
    %1351 = vmatpush2.msra.mxu0 %v1016
    %1352 = vmatprep.mubr.f32.mxu0 %v497
    %1353 = vmatmul.mubr.f32.gmra.mxu0 %v496
    %v1354 = vpop.f32.mrf.mxu0
    %v1355 = vadd.f32 0.0, %v1354
    %v1356 = vpop.f32.mrf.mxu0
    %1357 = vdwg.mxu0
    %1358 = vmatprep.subr.mxu0 0.0
    %1359 = vmatpush1.msra.mxu0 %v1109
    %1360 = vmatprep.subr.mxu0 0.0
    %1361 = vmatpush1.msra.mxu0 %v1106
    %1362 = vmatprep.subr.mxu0 0.0
    %1363 = vmatpush1.msra.mxu0 %v1103
    %1364 = vmatprep.subr.mxu0 0.0
    %1365 = vmatpush1.msra.mxu0 %v1100
    %1366 = vmatprep.subr.mxu0 0.0
    %1367 = vmatpush1.msra.mxu0 %v1097
    %1368 = vmatprep.subr.mxu0 0.0
    %1369 = vmatpush1.msra.mxu0 %v1094
    %1370 = vmatprep.subr.mxu0 0.0
    %1371 = vmatpush1.msra.mxu0 %v1091
    %1372 = vmatprep.subr.mxu0 0.0
    %1373 = vmatpush1.msra.mxu0 %v1088
    %1374 = vmatprep.subr.mxu0 0.0
    %1375 = vmatpush1.msra.mxu0 %v1085
    %1376 = vmatprep.subr.mxu0 0.0
    %1377 = vmatpush1.msra.mxu0 %v1082
    %1378 = vmatprep.subr.mxu0 0.0
    %1379 = vmatpush1.msra.mxu0 %v1079
    %1380 = vmatprep.subr.mxu0 0.0
    %1381 = vmatpush1.msra.mxu0 %v1076
    %1382 = vmatprep.subr.mxu0 0.0
    %1383 = vmatpush1.msra.mxu0 %v1073
    %1384 = vmatprep.subr.mxu0 0.0
    %1385 = vmatpush1.msra.mxu0 %v1070
    %1386 = vmatprep.subr.mxu0 0.0
    %1387 = vmatpush1.msra.mxu0 %v1067
    %1388 = vmatprep.subr.mxu0 0.0
    %1389 = vmatpush1.msra.mxu0 %v1064
    %1390 = vmatprep.subr.mxu0 0.0
    %1391 = vmatpush2.msra.mxu0 0.0
    %1392 = vmatprep.subr.mxu0 0.0
    %1393 = vmatpush2.msra.mxu0 0.0
    %1394 = vmatprep.subr.mxu0 0.0
    %1395 = vmatpush2.msra.mxu0 0.0
    %1396 = vmatprep.subr.mxu0 0.0
    %1397 = vmatpush2.msra.mxu0 0.0
    %1398 = vmatprep.subr.mxu0 0.0
    %1399 = vmatpush2.msra.mxu0 %v1145
    %1400 = vmatprep.subr.mxu0 0.0
    %1401 = vmatpush2.msra.mxu0 %v1142
    %1402 = vmatprep.subr.mxu0 0.0
    %1403 = vmatpush2.msra.mxu0 %v1139
    %1404 = vmatprep.subr.mxu0 0.0
    %1405 = vmatpush2.msra.mxu0 %v1136
    %1406 = vmatprep.subr.mxu0 0.0
    %1407 = vmatpush2.msra.mxu0 %v1133
    %1408 = vmatprep.subr.mxu0 0.0
    %1409 = vmatpush2.msra.mxu0 %v1130
    %1410 = vmatprep.subr.mxu0 0.0
    %1411 = vmatpush2.msra.mxu0 %v1127
    %1412 = vmatprep.subr.mxu0 0.0
    %1413 = vmatpush2.msra.mxu0 %v1124
    %1414 = vmatprep.subr.mxu0 0.0
    %1415 = vmatpush2.msra.mxu0 %v1121
    %1416 = vmatprep.subr.mxu0 0.0
    %1417 = vmatpush2.msra.mxu0 %v1118
    %1418 = vmatprep.subr.mxu0 0.0
    %1419 = vmatpush2.msra.mxu0 %v1115
    %1420 = vmatprep.subr.mxu0 0.0
    %1421 = vmatpush2.msra.mxu0 %v1112
    %1422 = vmatprep.mubr.f32.mxu0 %v682
    %1423 = vmatmul.mubr.f32.gmra.mxu0 %v498
    %v1424 = vpop.f32.mrf.mxu0
    %v1425 = vadd.f32 %v1355, %v1424
    %v1426 = vpop.f32.mrf.mxu0
    %1427 = vdwg.mxu0
    %v1428 = vmax.f32 %v822, %v1284
    %v1429 = vmax.f32 %v824, %v1286
    %v1430 = vmax.f32 %v963, %v1425
    %v1431 = vld [vmem:[%s6] sm:$0x7]
    %v1433 = vlaneseq
    %v1434 = vshrl.u32 %v1433, 7
    %v1435 = vsub.s32 0, %v1434
    %v1436 = vrot.slane %v1431, %v1435
    %v1437 = vlaneseq
    %v1438 = vshrl.u32 %v1437, 7
    %v1439 = vsub.s32 1, %v1438
    %v1440 = vrot.slane %v1431, %v1439
    %v1441 = vlaneseq
    %v1442 = vshrl.u32 %v1441, 7
    %v1443 = vsub.s32 2, %v1442
    %v1444 = vrot.slane %v1431, %v1443
    %v1448 = vadd.f32 %v1428, %v1436
    %v1449 = vadd.f32 %v1429, %v1440
    %v1450 = vadd.f32 %v1430, %v1444
    %v1451 = vmax.f32 %v1448, 0.0
    %v1452 = vmax.f32 %v1449, 0.0
    %v1453 = vmax.f32 %v1450, 0.0
    %v1454 = vld [vmem:[%s7] sm:$0xff]
    %v1455 = vld [vmem:[%s7 + $0x8] sm:$0xff]
    %v1456 = vld [vmem:[%s7 + $0x10] sm:$0xff]
    %v1457 = vld [vmem:[%s7 + $0x18] sm:$0xff]
    %v1458 = vld [vmem:[%s7 + $0x20] sm:$0xff]
    %v1459 = vld [vmem:[%s7 + $0x28] sm:$0xff]
    %v1460 = vld [vmem:[%s7 + $0x30] sm:$0xff]
    %v1461 = vld [vmem:[%s7 + $0x38] sm:$0xff]
    %v1462 = vld [vmem:[%s7 + $0x40] sm:$0xff]
    %v1463 = vld [vmem:[%s7 + $0x48] sm:$0xff]
    %v1464 = vld [vmem:[%s7 + $0x50] sm:$0xff]
    %v1465 = vld [vmem:[%s7 + $0x58] sm:$0xff]
    %v1466 = vld [vmem:[%s7 + $0x60] sm:$0xff]
    %v1467 = vld [vmem:[%s7 + $0x68] sm:$0xff]
    %v1468 = vld [vmem:[%s7 + $0x70] sm:$0xff]
    %v1469 = vld [vmem:[%s7 + $0x78] sm:$0xff]
    %v1470 = vld [vmem:[%s7 + $0x80] sm:$0xff]
    %v1471 = vld [vmem:[%s7 + $0x88] sm:$0xff]
    %v1472 = vld [vmem:[%s7 + $0x90] sm:$0xff]
    %v1473 = vld [vmem:[%s7 + $0x98] sm:$0xff]
    %v1474 = vld [vmem:[%s7 + $0xa0] sm:$0xff]
    %v1475 = vld [vmem:[%s7 + $0xa8] sm:$0xff]
    %v1476 = vld [vmem:[%s7 + $0xb0] sm:$0xff]
    %v1477 = vld [vmem:[%s7 + $0xb8] sm:$0xff]
    %v1478 = vld [vmem:[%s7 + $0xc0] sm:$0xff]
    %v1479 = vld [vmem:[%s7 + $0xc8] sm:$0xff]
    %v1480 = vld [vmem:[%s7 + $0xd0] sm:$0xff]
    %v1481 = vld [vmem:[%s7 + $0xd8] sm:$0xff]
    %v1482 = vld [vmem:[%s7 + $0xe0] sm:$0xff]
    %v1483 = vld [vmem:[%s7 + $0xe8] sm:$0xff]
    %v1484 = vld [vmem:[%s7 + $0xf0] sm:$0xff]
    %v1485 = vld [vmem:[%s7 + $0xf8] sm:$0xff]
    %v1486 = vld [vmem:[%s7 + $0x100] sm:$0xff]
    %v1487 = vld [vmem:[%s7 + $0x108] sm:$0xff]
    %v1488 = vld [vmem:[%s7 + $0x110] sm:$0xff]
    %v1489 = vld [vmem:[%s7 + $0x118] sm:$0xff]
    %v1490 = vld [vmem:[%s7 + $0x120] sm:$0xff]
    %v1491 = vld [vmem:[%s7 + $0x128] sm:$0xff]
    %v1492 = vld [vmem:[%s7 + $0x130] sm:$0xff]
    %v1493 = vld [vmem:[%s7 + $0x138] sm:$0xff]
    %v1494 = vld [vmem:[%s7 + $0x140] sm:$0xff]
    %v1495 = vld [vmem:[%s7 + $0x148] sm:$0xff]
    %v1496 = vld [vmem:[%s7 + $0x150] sm:$0xff]
    %v1497 = vld [vmem:[%s7 + $0x158] sm:$0xff]
    %v1498 = vld [vmem:[%s7 + $0x160] sm:$0xff]
    %v1499 = vld [vmem:[%s7 + $0x168] sm:$0xff]
    %v1500 = vld [vmem:[%s7 + $0x170] sm:$0xff]
    %v1501 = vld [vmem:[%s7 + $0x178] sm:$0xff]
    %v1502 = vld [vmem:[%s8] sm:$0x1]
    %v1504 = vlaneseq
    %v1505 = vshrl.u32 %v1504, 7
    %v1506 = vsub.s32 0, %v1505
    %v1507 = vrot.slane %v1502, %v1506
    %1509 = vmatprep.subr.mxu0 0.0
    %1510 = vmatpush1.msra.mxu0 %v1469
    %1511 = vmatprep.subr.mxu0 0.0
    %1512 = vmatpush1.msra.mxu0 %v1468
    %1513 = vmatprep.subr.mxu0 0.0
    %1514 = vmatpush1.msra.mxu0 %v1467
    %1515 = vmatprep.subr.mxu0 0.0
    %1516 = vmatpush1.msra.mxu0 %v1466
    %1517 = vmatprep.subr.mxu0 0.0
    %1518 = vmatpush1.msra.mxu0 %v1465
    %1519 = vmatprep.subr.mxu0 0.0
    %1520 = vmatpush1.msra.mxu0 %v1464
    %1521 = vmatprep.subr.mxu0 0.0
    %1522 = vmatpush1.msra.mxu0 %v1463
    %1523 = vmatprep.subr.mxu0 0.0
    %1524 = vmatpush1.msra.mxu0 %v1462
    %1525 = vmatprep.subr.mxu0 0.0
    %1526 = vmatpush1.msra.mxu0 %v1461
    %1527 = vmatprep.subr.mxu0 0.0
    %1528 = vmatpush1.msra.mxu0 %v1460
    %1529 = vmatprep.subr.mxu0 0.0
    %1530 = vmatpush1.msra.mxu0 %v1459
    %1531 = vmatprep.subr.mxu0 0.0
    %1532 = vmatpush1.msra.mxu0 %v1458
    %1533 = vmatprep.subr.mxu0 0.0
    %1534 = vmatpush1.msra.mxu0 %v1457
    %1535 = vmatprep.subr.mxu0 0.0
    %1536 = vmatpush1.msra.mxu0 %v1456
    %1537 = vmatprep.subr.mxu0 0.0
    %1538 = vmatpush1.msra.mxu0 %v1455
    %1539 = vmatprep.subr.mxu0 0.0
    %1540 = vmatpush1.msra.mxu0 %v1454
    %1541 = vmatprep.subr.mxu0 0.0
    %1542 = vmatpush2.msra.mxu0 %v1485
    %1543 = vmatprep.subr.mxu0 0.0
    %1544 = vmatpush2.msra.mxu0 %v1484
    %1545 = vmatprep.subr.mxu0 0.0
    %1546 = vmatpush2.msra.mxu0 %v1483
    %1547 = vmatprep.subr.mxu0 0.0
    %1548 = vmatpush2.msra.mxu0 %v1482
    %1549 = vmatprep.subr.mxu0 0.0
    %1550 = vmatpush2.msra.mxu0 %v1481
    %1551 = vmatprep.subr.mxu0 0.0
    %1552 = vmatpush2.msra.mxu0 %v1480
    %1553 = vmatprep.subr.mxu0 0.0
    %1554 = vmatpush2.msra.mxu0 %v1479
    %1555 = vmatprep.subr.mxu0 0.0
    %1556 = vmatpush2.msra.mxu0 %v1478
    %1557 = vmatprep.subr.mxu0 0.0
    %1558 = vmatpush2.msra.mxu0 %v1477
    %1559 = vmatprep.subr.mxu0 0.0
    %1560 = vmatpush2.msra.mxu0 %v1476
    %1561 = vmatprep.subr.mxu0 0.0
    %1562 = vmatpush2.msra.mxu0 %v1475
    %1563 = vmatprep.subr.mxu0 0.0
    %1564 = vmatpush2.msra.mxu0 %v1474
    %1565 = vmatprep.subr.mxu0 0.0
    %1566 = vmatpush2.msra.mxu0 %v1473
    %1567 = vmatprep.subr.mxu0 0.0
    %1568 = vmatpush2.msra.mxu0 %v1472
    %1569 = vmatprep.subr.mxu0 0.0
    %1570 = vmatpush2.msra.mxu0 %v1471
    %1571 = vmatprep.subr.mxu0 0.0
    %1572 = vmatpush2.msra.mxu0 %v1470
    %1573 = vmatprep.mubr.f32.mxu0 %v1452
    %1574 = vmatmul.mubr.f32.gmra.mxu0 %v1451
    %v1575 = vpop.f32.mrf.mxu0
    %v1576 = vadd.f32 %v1507, %v1575
    %v1577 = vpop.f32.mrf.mxu0
    %1578 = vdwg.mxu0
    %1579 = vmatprep.subr.mxu0 0.0
    %1580 = vmatpush1.msra.mxu0 %v1501
    %1581 = vmatprep.subr.mxu0 0.0
    %1582 = vmatpush1.msra.mxu0 %v1500
    %1583 = vmatprep.subr.mxu0 0.0
    %1584 = vmatpush1.msra.mxu0 %v1499
    %1585 = vmatprep.subr.mxu0 0.0
    %1586 = vmatpush1.msra.mxu0 %v1498
    %1587 = vmatprep.subr.mxu0 0.0
    %1588 = vmatpush1.msra.mxu0 %v1497
    %1589 = vmatprep.subr.mxu0 0.0
    %1590 = vmatpush1.msra.mxu0 %v1496
    %1591 = vmatprep.subr.mxu0 0.0
    %1592 = vmatpush1.msra.mxu0 %v1495
    %1593 = vmatprep.subr.mxu0 0.0
    %1594 = vmatpush1.msra.mxu0 %v1494
    %1595 = vmatprep.subr.mxu0 0.0
    %1596 = vmatpush1.msra.mxu0 %v1493
    %1597 = vmatprep.subr.mxu0 0.0
    %1598 = vmatpush1.msra.mxu0 %v1492
    %1599 = vmatprep.subr.mxu0 0.0
    %1600 = vmatpush1.msra.mxu0 %v1491
    %1601 = vmatprep.subr.mxu0 0.0
    %1602 = vmatpush1.msra.mxu0 %v1490
    %1603 = vmatprep.subr.mxu0 0.0
    %1604 = vmatpush1.msra.mxu0 %v1489
    %1605 = vmatprep.subr.mxu0 0.0
    %1606 = vmatpush1.msra.mxu0 %v1488
    %1607 = vmatprep.subr.mxu0 0.0
    %1608 = vmatpush1.msra.mxu0 %v1487
    %1609 = vmatprep.subr.mxu0 0.0
    %1610 = vmatpush1.msra.mxu0 %v1486
    %1611 = vmatprep.subr.mxu0 0.0
    %1612 = vmatpush2.msra.mxu0 0.0
    %1613 = vmatprep.subr.mxu0 0.0
    %1614 = vmatpush2.msra.mxu0 0.0
    %1615 = vmatprep.subr.mxu0 0.0
    %1616 = vmatpush2.msra.mxu0 0.0
    %1617 = vmatprep.subr.mxu0 0.0
    %1618 = vmatpush2.msra.mxu0 0.0
    %1619 = vmatprep.subr.mxu0 0.0
    %1620 = vmatpush2.msra.mxu0 0.0
    %1621 = vmatprep.subr.mxu0 0.0
    %1622 = vmatpush2.msra.mxu0 0.0
    %1623 = vmatprep.subr.mxu0 0.0
    %1624 = vmatpush2.msra.mxu0 0.0
    %1625 = vmatprep.subr.mxu0 0.0
    %1626 = vmatpush2.msra.mxu0 0.0
    %1627 = vmatprep.subr.mxu0 0.0
    %1628 = vmatpush2.msra.mxu0 0.0
    %1629 = vmatprep.subr.mxu0 0.0
    %1630 = vmatpush2.msra.mxu0 0.0
    %1631 = vmatprep.subr.mxu0 0.0
    %1632 = vmatpush2.msra.mxu0 0.0
    %1633 = vmatprep.subr.mxu0 0.0
    %1634 = vmatpush2.msra.mxu0 0.0
    %1635 = vmatprep.subr.mxu0 0.0
    %1636 = vmatpush2.msra.mxu0 0.0
    %1637 = vmatprep.subr.mxu0 0.0
    %1638 = vmatpush2.msra.mxu0 0.0
    %1639 = vmatprep.subr.mxu0 0.0
    %1640 = vmatpush2.msra.mxu0 0.0
    %1641 = vmatprep.subr.mxu0 0.0
    %1642 = vmatpush2.msra.mxu0 0.0
    %1643 = vmatprep.mubr.f32.mxu0 0.0
    %1644 = vmatmul.mubr.f32.gmra.mxu0 %v1453
    %v1645 = vpop.f32.mrf.mxu0
    %v1646 = vadd.f32 %v1576, %v1645
    %v1647 = vpop.f32.mrf.mxu0
    %1648 = vdwg.mxu0
    %v1649 = vmax.f32 %v1646, 0.0
    %v1650 = vld [vmem:[%s9] sm:$0xff]
    %v1651 = vld [vmem:[%s9 + $0x8] sm:$0xff]
    %v1652 = vld [vmem:[%s9 + $0x10] sm:$0xff]
    %v1653 = vld [vmem:[%s9 + $0x18] sm:$0xff]
    %v1654 = vld [vmem:[%s9 + $0x20] sm:$0xff]
    %v1655 = vld [vmem:[%s9 + $0x28] sm:$0xff]
    %v1656 = vld [vmem:[%s9 + $0x30] sm:$0xff]
    %v1657 = vld [vmem:[%s9 + $0x38] sm:$0xff]
    %v1658 = vld [vmem:[%s9 + $0x40] sm:$0xff]
    %v1659 = vld [vmem:[%s9 + $0x48] sm:$0xff]
    %v1660 = vld [vmem:[%s9 + $0x50] sm:$0xff]
    %v1661 = vld [vmem:[%s9 + $0x58] sm:$0xff]
    %v1662 = vld [vmem:[%s9 + $0x60] sm:$0xff]
    %v1663 = vld [vmem:[%s9 + $0x68] sm:$0xff]
    %v1664 = vld [vmem:[%s9 + $0x70] sm:$0xff]
    %v1665 = vld [vmem:[%s9 + $0x78] sm:$0xff]
    %v1666 = vld [vmem:[%s10] sm:$0x1]
    %v1668 = vlaneseq
    %v1669 = vshrl.u32 %v1668, 7
    %v1670 = vsub.s32 0, %v1669
    %v1671 = vrot.slane %v1666, %v1670
    %1673 = vmatprep.subr.mxu0 0.0
    %1674 = vmatpush1.msra.mxu0 %v1665
    %1675 = vmatprep.subr.mxu0 0.0
    %1676 = vmatpush1.msra.mxu0 %v1664
    %1677 = vmatprep.subr.mxu0 0.0
    %1678 = vmatpush1.msra.mxu0 %v1663
    %1679 = vmatprep.subr.mxu0 0.0
    %1680 = vmatpush1.msra.mxu0 %v1662
    %1681 = vmatprep.subr.mxu0 0.0
    %1682 = vmatpush1.msra.mxu0 %v1661
    %1683 = vmatprep.subr.mxu0 0.0
    %1684 = vmatpush1.msra.mxu0 %v1660
    %1685 = vmatprep.subr.mxu0 0.0
    %1686 = vmatpush1.msra.mxu0 %v1659
    %1687 = vmatprep.subr.mxu0 0.0
    %1688 = vmatpush1.msra.mxu0 %v1658
    %1689 = vmatprep.subr.mxu0 0.0
    %1690 = vmatpush1.msra.mxu0 %v1657
    %1691 = vmatprep.subr.mxu0 0.0
    %1692 = vmatpush1.msra.mxu0 %v1656
    %1693 = vmatprep.subr.mxu0 0.0
    %1694 = vmatpush1.msra.mxu0 %v1655
    %1695 = vmatprep.subr.mxu0 0.0
    %1696 = vmatpush1.msra.mxu0 %v1654
    %1697 = vmatprep.subr.mxu0 0.0
    %1698 = vmatpush1.msra.mxu0 %v1653
    %1699 = vmatprep.subr.mxu0 0.0
    %1700 = vmatpush1.msra.mxu0 %v1652
    %1701 = vmatprep.subr.mxu0 0.0
    %1702 = vmatpush1.msra.mxu0 %v1651
    %1703 = vmatprep.subr.mxu0 0.0
    %1704 = vmatpush1.msra.mxu0 %v1650
    %1705 = vmatprep.subr.mxu0 0.0
    %1706 = vmatpush2.msra.mxu0 0.0
    %1707 = vmatprep.subr.mxu0 0.0
    %1708 = vmatpush2.msra.mxu0 0.0
    %1709 = vmatprep.subr.mxu0 0.0
    %1710 = vmatpush2.msra.mxu0 0.0
    %1711 = vmatprep.subr.mxu0 0.0
    %1712 = vmatpush2.msra.mxu0 0.0
    %1713 = vmatprep.subr.mxu0 0.0
    %1714 = vmatpush2.msra.mxu0 0.0
    %1715 = vmatprep.subr.mxu0 0.0
    %1716 = vmatpush2.msra.mxu0 0.0
    %1717 = vmatprep.subr.mxu0 0.0
    %1718 = vmatpush2.msra.mxu0 0.0
    %1719 = vmatprep.subr.mxu0 0.0
    %1720 = vmatpush2.msra.mxu0 0.0
    %1721 = vmatprep.subr.mxu0 0.0
    %1722 = vmatpush2.msra.mxu0 0.0
    %1723 = vmatprep.subr.mxu0 0.0
    %1724 = vmatpush2.msra.mxu0 0.0
    %1725 = vmatprep.subr.mxu0 0.0
    %1726 = vmatpush2.msra.mxu0 0.0
    %1727 = vmatprep.subr.mxu0 0.0
    %1728 = vmatpush2.msra.mxu0 0.0
    %1729 = vmatprep.subr.mxu0 0.0
    %1730 = vmatpush2.msra.mxu0 0.0
    %1731 = vmatprep.subr.mxu0 0.0
    %1732 = vmatpush2.msra.mxu0 0.0
    %1733 = vmatprep.subr.mxu0 0.0
    %1734 = vmatpush2.msra.mxu0 0.0
    %1735 = vmatprep.subr.mxu0 0.0
    %1736 = vmatpush2.msra.mxu0 0.0
    %1737 = vmatprep.mubr.f32.mxu0 0.0
    %1738 = vmatmul.mubr.f32.gmra.mxu0 %v1649
    %v1739 = vpop.f32.mrf.mxu0
    %v1740 = vadd.f32 %v1671, %v1739
    %v1741 = vpop.f32.mrf.mxu0
    %1742 = vdwg.mxu0
    %1743 = vst [vmem:[#allocation5] sm:$0xff] %v1740
    // Predicated region
    $region50: #{tpu_custom_call.1} parent=1 // pred_check
      _
    $region51: #{tpu_custom_call.1} parent=1 // pred_check_branch
      %1745 = sbr.rel (0) target = $region53
    $region52: #{tpu_custom_call.1} parent=1 // pred_region
      %s1747 = ssub.s32 128, 128
      %1748 = vsyncadd [#allocation4], %s1747
      %s1750 = sshll.u32 [#allocation5], 4
      %s1751 = int_to_ptr.vmem [resolvable:$true] %s1750
      %1753 = dma.vmem_to_hbm [thread:$0]  %s1751, 128, %s11, [#allocation4]
    $region53: #{tpu_custom_call.1} parent=1 // pred_fallthru
      _
    // Predicated region
    $region54: #{tpu_custom_call.1} parent=1 // pred_check
      _
    $region55: #{tpu_custom_call.1} parent=1 // pred_check_branch
      %1755 = sbr.rel (0) target = $region57
    $region56: #{tpu_custom_call.1} parent=1 // pred_region
      %1756 = dma.done [#allocation4], 128
    $region57: #{tpu_custom_call.1} parent=1 // pred_fallthru
      _
    %1757 = vsyncpa [#allocation3], 1
    %1758 = vsyncpa [#allocation4], 1

</llo_original>
